<compile_context>
chip_gen: v5e
topology: v5e:2x2
jax: 0.10.0
libtpu: 0.0.40
codegen_flags: <defaults>
</compile_context>

<pallas_src>
import jax
import jax.numpy as jnp
from jax import lax
from jax.experimental import pallas as pl
from jax.experimental.pallas import tpu as pltpu


def _round_up(x, m):
    return ((x + m - 1) // m) * m


_BIG = 3.0e38  # "never the minimum" sentinel for padded memory-bank rows


# ----------------------------- Pallas kernels -----------------------------

def _avgpool3x3_kernel(x_ref, out_ref, xp_ref, hs_ref):
    # x_ref/out_ref: (1, H, W, Ct) NHWC tile
    # xp_ref: (H, W+2, Ct) scratch (W-halo), hs_ref: (H+2, W, Ct) scratch (H-halo)
    H, W, C = out_ref.shape[1], out_ref.shape[2], out_ref.shape[3]
    # zero only the 1-pixel halo (count_include_pad=True zero padding), every
    # step (scratch is per-core; cheap: 2 rows + 2 cols)
    xp_ref[:, 0:1, :] = jnp.zeros((H, 1, C), jnp.float32)
    xp_ref[:, W + 1:W + 2, :] = jnp.zeros((H, 1, C), jnp.float32)
    xp_ref[:, 1:W + 1, :] = x_ref[0]
    hs_ref[0:1, :, :] = jnp.zeros((1, W, C), jnp.float32)
    hs_ref[H + 1:H + 2, :, :] = jnp.zeros((1, W, C), jnp.float32)
    # separable 3x3 average: horizontal 3-tap, then vertical 3-tap
    hs_ref[1:H + 1, :, :] = (xp_ref[:, 0:W, :] + xp_ref[:, 1:W + 1, :]
                             + xp_ref[:, 2:W + 2, :])
    out_ref[0] = (hs_ref[0:H, :, :] + hs_ref[1:H + 1, :, :]
                  + hs_ref[2:H + 2, :, :]) * (1.0 / 9.0)


def avg_pool_3x3_s1_p1(x, tile_c=128):
    """nn.AvgPool2d(3, 1, 1), count_include_pad=True semantics, NHWC layout."""
    B, H, W, C = x.shape
    ct = tile_c if (C % tile_c == 0) else C        # channel-independent: tile C
    return pl.pallas_call(
        _avgpool3x3_kernel,
        grid=(B, C // ct),
        in_specs=[pl.BlockSpec((1, H, W, ct), lambda b, c: (b, 0, 0, c))],
        out_specs=pl.BlockSpec((1, H, W, ct), lambda b, c: (b, 0, 0, c)),
        out_shape=jax.ShapeDtypeStruct((B, H, W, C), jnp.float32),
        scratch_shapes=[pltpu.VMEM((H, W + 2, ct), jnp.float32),
                        pltpu.VMEM((H + 2, W, ct), jnp.float32)],
        compiler_params=pltpu.CompilerParams(
            dimension_semantics=("parallel", "parallel")),
    )(x)


def _nn_min_kernel(x_ref, y_ref, ynorm_ref, minp_ref, loc_ref):
    # x_ref:     (TM, Dp)  bf16 embedding rows (resident across the bank axis)
    # y_ref:     (TMB, Dp) bf16 memory-bank tile
    # ynorm_ref: (TMB, 1)  f32 precomputed bank row norms (padded rows = _BIG)
    # minp_ref:  (1, TM)   f32 running min of (-2 x·y + ||y||^2)   (lane-dense)
    # loc_ref:   (1, TM)   int32 running argmin                    (lane-dense)
    j = pl.program_id(1)

    @pl.when(j == 0)
    def _():
        minp_ref[...] = jnp.full_like(minp_ref, jnp.inf)
        loc_ref[...] = jnp.zeros_like(loc_ref)

    # partial squared distance (x-norm is constant per row -> applied outside):
    #   part[m, n] = -2 <y_m, x_n> + ||y_m||^2            shape (TMB, TM)
    part = -2.0 * lax.dot_general(
        y_ref[...], x_ref[...], (((1,), (1,)), ((), ())),
        preferred_element_type=jnp.float32) + ynorm_ref[...]
    tile_min = jnp.min(part, axis=0, keepdims=True)                 # (1, TM)
    # tile-local argmin (first index achieving the min, torch tie-breaking);
    # the global offset j*TMB is added only to the (1, TM) result.
    ids = lax.broadcasted_iota(jnp.int32, part.shape, 0)
    tile_arg = jnp.min(jnp.where(part == tile_min, ids, jnp.int32(2 ** 30)),
                       axis=0, keepdims=True) + j * part.shape[0]   # (1, TM)
    better = tile_min < minp_ref[...]                               # strict: keep first
    loc_ref[...] = jnp.where(better, tile_arg, loc_ref[...])
    minp_ref[...] = jnp.where(better, tile_min, minp_ref[...])


def nearest_neighbor_1(embedding, memory_bank, tile_rows=512, tile_bank=1024):
    """Min euclidean distance + argmin over the memory bank, per embedding row."""
    N, D = embedding.shape
    M, _ = memory_bank.shape
    Dp = _round_up(D, 128)
    tm = min(tile_rows, _round_up(N, 8))
    Np = _round_up(N, tm)
    tmb = min(tile_bank, _round_up(M, 8))
    Mp = _round_up(M, tmb)

    # hoisted out of the per-tile kernel path: casts, padding, bank norms
    emb_f32 = embedding.astype(jnp.float32)
    x_bf16 = jnp.pad(emb_f32, ((0, Np - N), (0, Dp - D))).astype(jnp.bfloat16)
    mb_f32 = memory_bank.astype(jnp.float32)
    y_bf16 = jnp.pad(mb_f32, ((0, Mp - M), (0, Dp - D))).astype(jnp.bfloat16)
    y_norm = jnp.sum(mb_f32 * mb_f32, axis=1, keepdims=True)          # (M, 1)
    y_norm = jnp.pad(y_norm, ((0, Mp - M), (0, 0)), constant_values=_BIG)

    minp, locs = pl.pallas_call(
        _nn_min_kernel,
        grid=(Np // tm, Mp // tmb),
        in_specs=[
            pl.BlockSpec((tm, Dp), lambda i, j: (i, 0)),
            pl.BlockSpec((tmb, Dp), lambda i, j: (j, 0)),
            pl.BlockSpec((tmb, 1), lambda i, j: (j, 0)),
        ],
        out_specs=(
            pl.BlockSpec((1, tm), lambda i, j: (0, i)),
            pl.BlockSpec((1, tm), lambda i, j: (0, i)),
        ),
        out_shape=(
            jax.ShapeDtypeStruct((1, Np), jnp.float32),
            jax.ShapeDtypeStruct((1, Np), jnp.int32),
        ),
        compiler_params=pltpu.CompilerParams(
            dimension_semantics=("parallel", "arbitrary")),
    )(x_bf16, y_bf16, y_norm)
    # finalize once per row: add the constant x-norm term and take a single sqrt
    x_norm = jnp.sum(emb_f32 * emb_f32, axis=1)                       # (N,)
    scores = jnp.sqrt(jnp.maximum(minp[0, :N] + x_norm, 0.0))
    return scores, locs[0, :N]


def _sqdist_kernel(x_ref, xnorm_ref, y_ref, ynorm_ref, out_ref):
    # x_ref: (Nx, Dp) bf16; xnorm_ref: (Nx, 1) f32 (precomputed, not per-tile);
    # y_ref: (TMB, Dp) bf16; ynorm_ref: (1, TMB) f32
    d = (xnorm_ref[...]
         - 2.0 * lax.dot_general(x_ref[...], y_ref[...],
                                 (((1,), (1,)), ((), ())),
                                 preferred_element_type=jnp.float32)
         + ynorm_ref[...])
    out_ref[...] = jnp.maximum(d, 0.0)


def squared_euclidean_dist(x, memory_bank, tile_bank=2048):
    """Pairwise *squared* distances (sqrt skipped: only used through top-k)."""
    Nx, D = x.shape
    M, _ = memory_bank.shape
    Dp = _round_up(D, 128)
    tmb = min(tile_bank, _round_up(M, 8))
    Mp = _round_up(M, tmb)

    x_f32 = x.astype(jnp.float32)
    x_bf16 = jnp.pad(x_f32, ((0, 0), (0, Dp - D))).astype(jnp.bfloat16)
    x_norm = jnp.sum(x_f32 * x_f32, axis=1, keepdims=True)            # (Nx, 1)
    mb_f32 = memory_bank.astype(jnp.float32)
    y_bf16 = jnp.pad(mb_f32, ((0, Mp - M), (0, Dp - D))).astype(jnp.bfloat16)
    y_norm = jnp.pad(jnp.sum(mb_f32 * mb_f32, axis=1), (0, Mp - M),
                     constant_values=_BIG)[None, :]                   # (1, Mp)

    out = pl.pallas_call(
        _sqdist_kernel,
        grid=(Mp // tmb,),
        in_specs=[
            pl.BlockSpec((Nx, Dp), lambda j: (0, 0)),
            pl.BlockSpec((Nx, 1), lambda j: (0, 0)),
            pl.BlockSpec((tmb, Dp), lambda j: (j, 0)),
            pl.BlockSpec((1, tmb), lambda j: (0, j)),
        ],
        out_specs=pl.BlockSpec((Nx, tmb), lambda j: (0, j)),
        out_shape=jax.ShapeDtypeStruct((Nx, Mp), jnp.float32),
        compiler_params=pltpu.CompilerParams(dimension_semantics=("parallel",)),
    )(x_bf16, x_norm, y_bf16, y_norm)
    return out[:, :M]


def _blur_kernel(s_ref, kh_ref, kwt_ref, out_ref):
    # s_ref: (1, h, w) patch scores; kh: (H_out, h); kwt: (w, W_pad)
    s = s_ref[0]
    tmp = jnp.dot(s, kwt_ref[...], preferred_element_type=jnp.float32)      # (h, W_pad)
    out_ref[0] = jnp.dot(kh_ref[...], tmp, preferred_element_type=jnp.float32)


def _gaussian_band_matrix(n, sigma):
    ksize = 2 * int(4.0 * sigma + 0.5) + 1
    r = ksize // 2
    xs = jnp.arange(ksize, dtype=jnp.float32) - r
    g = jnp.exp(-(xs ** 2) / (2.0 * sigma * sigma))
    g = g / jnp.sum(g)
    i = jnp.arange(n)[:, None]
    j = jnp.arange(n)[None, :]
    off = j - i + r
    valid = (off >= 0) & (off < ksize)
    return jnp.where(valid, g[jnp.clip(off, 0, ksize - 1)], 0.0).astype(jnp.float32)


def _upsample_matrix(n_out, n_in):
    # nearest-neighbor upsample (integer scale) as a (n_out, n_in) 0/1 matrix
    scale = n_out // n_in
    src = jnp.arange(n_out) // scale
    return (src[:, None] == jnp.arange(n_in)[None, :]).astype(jnp.float32)


def upsample_and_blur(score_map, out_h, out_w, sigma=4.0):
    """nearest-upsample + separable Gaussian blur fused into two band matmuls."""
    # TODO(synk): anomalib's GaussianBlur2d uses kornia-style reflect padding;
    # zero 'SAME' padding is used here (reflect is ill-defined for kernel > image).
    B, h, w = score_map.shape
    Wp = _round_up(out_w, 128)  # lane-dense output stores; cropped after the call
    kh = _gaussian_band_matrix(out_h, sigma) @ _upsample_matrix(out_h, h)     # (H_out, h)
    kwt = _upsample_matrix(out_w, w).T @ _gaussian_band_matrix(out_w, sigma)  # (w, W_out)
    kwt = jnp.pad(kwt, ((0, 0), (0, Wp - out_w)))                             # (w, W_pad)
    out = pl.pallas_call(
        _blur_kernel,
        grid=(B,),
        in_specs=[pl.BlockSpec((1, h, w), lambda b: (b, 0, 0)),
                  pl.BlockSpec((out_h, h), lambda b: (0, 0)),
                  pl.BlockSpec((w, Wp), lambda b: (0, 0))],
        out_specs=pl.BlockSpec((1, out_h, Wp), lambda b: (b, 0, 0)),
        out_shape=jax.ShapeDtypeStruct((B, out_h, Wp), jnp.float32),
        compiler_params=pltpu.CompilerParams(dimension_semantics=("parallel",)),
    )(score_map, kh, kwt)
    return out[:, :, :out_w]


# ----------------------------- glue (plain JAX) -----------------------------

IMAGENET_MEAN = jnp.array([0.485, 0.456, 0.406], jnp.float32).reshape(1, 3, 1, 1)
IMAGENET_STD = jnp.array([0.229, 0.224, 0.225], jnp.float32).reshape(1, 3, 1, 1)
NUM_NEIGHBORS = 9


def make_params(key, c2=16, c3=32, mem_size=256):
    k1, k2, k3 = jax.random.split(key, 3)
    return {
        "w2": 0.1 * jax.random.normal(k1, (c2, 3, 3, 3), jnp.float32),
        "w3": 0.1 * jax.random.normal(k2, (c3, 3, 3, 3), jnp.float32),
        "memory_bank": jax.random.normal(k3, (mem_size, c2 + c3), jnp.float32),
    }


def _backbone_stub(x, w2, w3):
    # TODO(synk): pretrained wide_resnet50_2 FeatureExtractor has no clean
    # Pallas equivalent; replaced by a deterministic strided-conv stub giving
    # "layer2" (/4 spatial) and "layer3" (/8 spatial) feature maps (NHWC out).
    f2 = lax.conv_general_dilated(x, w2, window_strides=(4, 4),
                                  padding=((1, 1), (1, 1)),
                                  dimension_numbers=("NCHW", "OIHW", "NHWC"))
    f3 = lax.conv_general_dilated(x, w3, window_strides=(8, 8),
                                  padding=((1, 1), (1, 1)),
                                  dimension_numbers=("NCHW", "OIHW", "NHWC"))
    return {"layer2": f2, "layer3": f3}


def _euclid_dist_batched(x, y):
    # x: (B, 1, D), y: (B, K, D) -> (B, 1, K).  Tiny; plain JAX (sqrt kept: the
    # actual distance values feed the softmax weights).
    xn = jnp.sum(x * x, -1, keepdims=True)
    yn = jnp.sum(y * y, -1, keepdims=True)
    res = xn - 2.0 * jnp.einsum("bid,bjd->bij", x, y) + jnp.swapaxes(yn, -2, -1)
    return jnp.sqrt(jnp.maximum(res, 0.0))


def compute_anomaly_score(patch_scores, locations, embedding, memory_bank):
    B, num_patches = patch_scores.shape
    max_patches = jnp.argmax(patch_scores, axis=1)                        # (B,)
    emb = embedding.reshape(B, num_patches, -1)
    max_feats = emb[jnp.arange(B), max_patches]                           # (B, D)
    score = patch_scores[jnp.arange(B), max_patches]                      # (B,)
    nn_index = locations[jnp.arange(B), max_patches]                      # (B,)
    nn_sample = memory_bank[nn_index]                                     # (B, D)
    d2 = squared_euclidean_dist(nn_sample, memory_bank)                   # Pallas (B, M)
    _, support = lax.top_k(-d2, NUM_NEIGHBORS)                            # 9 smallest
    mb_sup = memory_bank[support]                                         # (B, 9, D)
    dists = _euclid_dist_batched(max_feats[:, None, :], mb_sup)           # (B, 1, 9)
    weights = (1.0 - jax.nn.softmax(dists[:, 0, :], axis=1))[:, 0]        # (B,)
    return weights * score


@jax.jit
def patchcore_forward(x, params):
    # normalize (NCHW input, PyTorch convention)
    x = (x - IMAGENET_MEAN) / IMAGENET_STD
    # feature extraction (stub, NHWC out) + AvgPool2d(3,1,1) feature pooler (Pallas)
    feats = _backbone_stub(x, params["w2"], params["w3"])
    feats = {k: avg_pool_3x3_s1_p1(v) for k, v in feats.items()}
    # generate_embedding: nearest-upsample layer3 to layer2 size, concat channels
    f2, f3 = feats["layer2"], feats["layer3"]
    f3u = jnp.repeat(jnp.repeat(f3, f2.shape[1] // f3.shape[1], axis=1),
                     f2.shape[2] // f3.shape[2], axis=2)
    embedding = jnp.concatenate([f2, f3u], axis=3)                        # (B, h, w, D)
    B, h, w, D = embedding.shape
    emb_flat = embedding.reshape(-1, D)                                   # NHWC: no transpose
    memory_bank = params["memory_bank"]
    # nearest_neighbors(n=1) (Pallas, bank-tiled online min/argmin)
    patch_scores, locations = nearest_neighbor_1(emb_flat, memory_bank)
    patch_scores = patch_scores.reshape(B, -1)
    locations = locations.reshape(B, -1)
    anomaly_score = compute_anomaly_score(patch_scores, locations, emb_flat, memory_bank)
    # anomaly map: fused nearest-upsample + Gaussian blur (Pallas)
    score_map = patch_scores.reshape(B, h, w)
    H_in, W_in = x.shape[2], x.shape[3]
    anomaly_map = upsample_and_blur(score_map, H_in, W_in, sigma=4.0)     # (B, H, W)
    return anomaly_map, anomaly_score


if __name__ == "__main__":
    key = jax.random.PRNGKey(0)
    kx, kp = jax.random.split(key)
    x = jax.random.uniform(kx, (2, 3, 32, 32), jnp.float32)
    params = make_params(kp)
    anomaly_map, anomaly_score = patchcore_forward(x, params)
    jax.block_until_ready((anomaly_map, anomaly_score))
    assert anomaly_map.shape == (2, 32, 32)
    assert anomaly_score.shape == (2,)
    assert bool(jnp.all(jnp.isfinite(anomaly_map))) and bool(jnp.all(jnp.isfinite(anomaly_score)))
    print("KERNEL_OK")
</pallas_src>

<mosaic_0001>
module attributes {stable_mosaic.version = 11 : i64} {
  func.func @_avgpool3x3_kernel(%arg0: i32, %arg1: i32, %arg2: memref<1x8x8x16xf32, #tpu.memory_space<vmem>>, %arg3: memref<1x8x8x16xf32, #tpu.memory_space<vmem>>, %arg4: memref<8x10x16xf32, #tpu.memory_space<vmem>>, %arg5: memref<10x8x16xf32, #tpu.memory_space<vmem>>) attributes {dimension_semantics = [#tpu.dimension_semantics<parallel>, #tpu.dimension_semantics<parallel>], iteration_bounds = array<i64: 2, 1>, scalar_prefetch = 0 : i64, scratch_operands = 2 : i64, tpu.core_type = #tpu.core_type<tc>, window_params = [{transform_indices = @transform_0, window_bounds = array<i64: 1, 8, 8, 16>}, {transform_indices = @transform_1, window_bounds = array<i64: 1, 8, 8, 16>}]} {
    %cst = arith.constant 0.000000e+00 : f32
    %0 = vector.broadcast %cst : f32 to vector<8x1x16xf32>
    %c0 = arith.constant 0 : index
    %c0_0 = arith.constant 0 : index
    %c0_1 = arith.constant 0 : index
    %1 = vector.load %arg4[%c0, %c0_0, %c0_1] : memref<8x10x16xf32, #tpu.memory_space<vmem>>, vector<8x1x16xf32>
    tpu.vector_store %arg4[%c0, %c0_0, %c0_1], %0 {strides = array<i32>} : memref<8x10x16xf32, #tpu.memory_space<vmem>>, vector<8x1x16xf32>,
    %cst_2 = arith.constant 0.000000e+00 : f32
    %2 = vector.broadcast %cst_2 : f32 to vector<8x1x16xf32>
    %c0_3 = arith.constant 0 : index
    %c9 = arith.constant 9 : index
    %c0_4 = arith.constant 0 : index
    %3 = vector.load %arg4[%c0_3, %c9, %c0_4] : memref<8x10x16xf32, #tpu.memory_space<vmem>>, vector<8x1x16xf32>
    tpu.vector_store %arg4[%c0_3, %c9, %c0_4], %2 {strides = array<i32>} : memref<8x10x16xf32, #tpu.memory_space<vmem>>, vector<8x1x16xf32>,
    %c0_5 = arith.constant 0 : index
    %c0_6 = arith.constant 0 : index
    %c0_7 = arith.constant 0 : index
    %c0_8 = arith.constant 0 : index
    %4 = vector.load %arg2[%c0_5, %c0_6, %c0_7, %c0_8] : memref<1x8x8x16xf32, #tpu.memory_space<vmem>>, vector<1x8x8x16xf32>
    %5 = vector.shape_cast %4 : vector<1x8x8x16xf32> to vector<8x8x16xf32>
    %c0_9 = arith.constant 0 : index
    %c1 = arith.constant 1 : index
    %c0_10 = arith.constant 0 : index
    %6 = vector.load %arg4[%c0_9, %c1, %c0_10] : memref<8x10x16xf32, #tpu.memory_space<vmem>>, vector<8x8x16xf32>
    tpu.vector_store %arg4[%c0_9, %c1, %c0_10], %5 {strides = array<i32>} : memref<8x10x16xf32, #tpu.memory_space<vmem>>, vector<8x8x16xf32>,
    %cst_11 = arith.constant 0.000000e+00 : f32
    %7 = vector.broadcast %cst_11 : f32 to vector<1x8x16xf32>
    %c0_12 = arith.constant 0 : index
    %c0_13 = arith.constant 0 : index
    %c0_14 = arith.constant 0 : index
    %8 = vector.load %arg5[%c0_12, %c0_13, %c0_14] : memref<10x8x16xf32, #tpu.memory_space<vmem>>, vector<1x8x16xf32>
    tpu.vector_store %arg5[%c0_12, %c0_13, %c0_14], %7 {strides = array<i32>} : memref<10x8x16xf32, #tpu.memory_space<vmem>>, vector<1x8x16xf32>,
    %cst_15 = arith.constant 0.000000e+00 : f32
    %9 = vector.broadcast %cst_15 : f32 to vector<1x8x16xf32>
    %c9_16 = arith.constant 9 : index
    %c0_17 = arith.constant 0 : index
    %c0_18 = arith.constant 0 : index
    %10 = vector.load %arg5[%c9_16, %c0_17, %c0_18] : memref<10x8x16xf32, #tpu.memory_space<vmem>>, vector<1x8x16xf32>
    tpu.vector_store %arg5[%c9_16, %c0_17, %c0_18], %9 {strides = array<i32>} : memref<10x8x16xf32, #tpu.memory_space<vmem>>, vector<1x8x16xf32>,
    %c0_19 = arith.constant 0 : index
    %c0_20 = arith.constant 0 : index
    %c0_21 = arith.constant 0 : index
    %11 = vector.load %arg4[%c0_19, %c0_20, %c0_21] : memref<8x10x16xf32, #tpu.memory_space<vmem>>, vector<8x8x16xf32>
    %c0_22 = arith.constant 0 : index
    %c1_23 = arith.constant 1 : index
    %c0_24 = arith.constant 0 : index
    %12 = vector.load %arg4[%c0_22, %c1_23, %c0_24] : memref<8x10x16xf32, #tpu.memory_space<vmem>>, vector<8x8x16xf32>
    %13 = arith.addf %11, %12 : vector<8x8x16xf32>
    %c0_25 = arith.constant 0 : index
    %c2 = arith.constant 2 : index
    %c0_26 = arith.constant 0 : index
    %14 = vector.load %arg4[%c0_25, %c2, %c0_26] : memref<8x10x16xf32, #tpu.memory_space<vmem>>, vector<8x8x16xf32>
    %15 = arith.addf %13, %14 : vector<8x8x16xf32>
    %c1_27 = arith.constant 1 : index
    %c0_28 = arith.constant 0 : index
    %c0_29 = arith.constant 0 : index
    %16 = vector.load %arg5[%c1_27, %c0_28, %c0_29] : memref<10x8x16xf32, #tpu.memory_space<vmem>>, vector<8x8x16xf32>
    tpu.vector_store %arg5[%c1_27, %c0_28, %c0_29], %15 {strides = array<i32>} : memref<10x8x16xf32, #tpu.memory_space<vmem>>, vector<8x8x16xf32>,
    %c0_30 = arith.constant 0 : index
    %c0_31 = arith.constant 0 : index
    %c0_32 = arith.constant 0 : index
    %17 = vector.load %arg5[%c0_30, %c0_31, %c0_32] : memref<10x8x16xf32, #tpu.memory_space<vmem>>, vector<8x8x16xf32>
    %c1_33 = arith.constant 1 : index
    %c0_34 = arith.constant 0 : index
    %c0_35 = arith.constant 0 : index
    %18 = vector.load %arg5[%c1_33, %c0_34, %c0_35] : memref<10x8x16xf32, #tpu.memory_space<vmem>>, vector<8x8x16xf32>
    %19 = arith.addf %17, %18 : vector<8x8x16xf32>
    %c2_36 = arith.constant 2 : index
    %c0_37 = arith.constant 0 : index
    %c0_38 = arith.constant 0 : index
    %20 = vector.load %arg5[%c2_36, %c0_37, %c0_38] : memref<10x8x16xf32, #tpu.memory_space<vmem>>, vector<8x8x16xf32>
    %21 = arith.addf %19, %20 : vector<8x8x16xf32>
    %cst_39 = arith.constant 0.111111112 : f32
    %22 = vector.broadcast %cst_39 : f32 to vector<8x8x16xf32>
    %23 = arith.mulf %21, %22 : vector<8x8x16xf32>
    %c0_40 = arith.constant 0 : index
    %c0_41 = arith.constant 0 : index
    %c0_42 = arith.constant 0 : index
    %c0_43 = arith.constant 0 : index
    %24 = vector.load %arg3[%c0_40, %c0_41, %c0_42, %c0_43] : memref<1x8x8x16xf32, #tpu.memory_space<vmem>>, vector<1x8x8x16xf32>
    %25 = vector.shape_cast %24 : vector<1x8x8x16xf32> to vector<8x8x16xf32>
    %26 = vector.shape_cast %23 : vector<8x8x16xf32> to vector<1x8x8x16xf32>
    tpu.vector_store %arg3[%c0_40, %c0_41, %c0_42, %c0_43], %26 {strides = array<i32>} : memref<1x8x8x16xf32, #tpu.memory_space<vmem>>, vector<1x8x8x16xf32>,
    return
  }
  func.func @transform_0(%arg0: i32, %arg1: i32) -> (i32, i32, i32, i32) {
    %c0_i32 = arith.constant 0 : i32
    %c0_i32_0 = arith.constant 0 : i32
    %c0_i32_1 = arith.constant 0 : i32
    return %arg0, %c0_i32, %c0_i32_0, %arg1 : i32, i32, i32, i32
  }
  func.func @transform_1(%arg0: i32, %arg1: i32) -> (i32, i32, i32, i32) {
    %c0_i32 = arith.constant 0 : i32
    %c0_i32_0 = arith.constant 0 : i32
    %c0_i32_1 = arith.constant 0 : i32
    return %arg0, %c0_i32, %c0_i32_0, %arg1 : i32, i32, i32, i32
  }
}

module attributes {stable_mosaic.version = 11 : i64} {
  func.func @_avgpool3x3_kernel(%arg0: i32, %arg1: i32, %arg2: memref<1x4x4x32xf32, #tpu.memory_space<vmem>>, %arg3: memref<1x4x4x32xf32, #tpu.memory_space<vmem>>, %arg4: memref<4x6x32xf32, #tpu.memory_space<vmem>>, %arg5: memref<6x4x32xf32, #tpu.memory_space<vmem>>) attributes {dimension_semantics = [#tpu.dimension_semantics<parallel>, #tpu.dimension_semantics<parallel>], iteration_bounds = array<i64: 2, 1>, scalar_prefetch = 0 : i64, scratch_operands = 2 : i64, tpu.core_type = #tpu.core_type<tc>, window_params = [{transform_indices = @transform_0, window_bounds = array<i64: 1, 4, 4, 32>}, {transform_indices = @transform_1, window_bounds = array<i64: 1, 4, 4, 32>}]} {
    %cst = arith.constant 0.000000e+00 : f32
    %0 = vector.broadcast %cst : f32 to vector<4x1x32xf32>
    %c0 = arith.constant 0 : index
    %c0_0 = arith.constant 0 : index
    %c0_1 = arith.constant 0 : index
    %1 = vector.load %arg4[%c0, %c0_0, %c0_1] : memref<4x6x32xf32, #tpu.memory_space<vmem>>, vector<4x1x32xf32>
    tpu.vector_store %arg4[%c0, %c0_0, %c0_1], %0 {strides = array<i32>} : memref<4x6x32xf32, #tpu.memory_space<vmem>>, vector<4x1x32xf32>,
    %cst_2 = arith.constant 0.000000e+00 : f32
    %2 = vector.broadcast %cst_2 : f32 to vector<4x1x32xf32>
    %c0_3 = arith.constant 0 : index
    %c5 = arith.constant 5 : index
    %c0_4 = arith.constant 0 : index
    %3 = vector.load %arg4[%c0_3, %c5, %c0_4] : memref<4x6x32xf32, #tpu.memory_space<vmem>>, vector<4x1x32xf32>
    tpu.vector_store %arg4[%c0_3, %c5, %c0_4], %2 {strides = array<i32>} : memref<4x6x32xf32, #tpu.memory_space<vmem>>, vector<4x1x32xf32>,
    %c0_5 = arith.constant 0 : index
    %c0_6 = arith.constant 0 : index
    %c0_7 = arith.constant 0 : index
    %c0_8 = arith.constant 0 : index
    %4 = vector.load %arg2[%c0_5, %c0_6, %c0_7, %c0_8] : memref<1x4x4x32xf32, #tpu.memory_space<vmem>>, vector<1x4x4x32xf32>
    %5 = vector.shape_cast %4 : vector<1x4x4x32xf32> to vector<4x4x32xf32>
    %c0_9 = arith.constant 0 : index
    %c1 = arith.constant 1 : index
    %c0_10 = arith.constant 0 : index
    %6 = vector.load %arg4[%c0_9, %c1, %c0_10] : memref<4x6x32xf32, #tpu.memory_space<vmem>>, vector<4x4x32xf32>
    tpu.vector_store %arg4[%c0_9, %c1, %c0_10], %5 {strides = array<i32>} : memref<4x6x32xf32, #tpu.memory_space<vmem>>, vector<4x4x32xf32>,
    %cst_11 = arith.constant 0.000000e+00 : f32
    %7 = vector.broadcast %cst_11 : f32 to vector<1x4x32xf32>
    %c0_12 = arith.constant 0 : index
    %c0_13 = arith.constant 0 : index
    %c0_14 = arith.constant 0 : index
    %8 = vector.load %arg5[%c0_12, %c0_13, %c0_14] : memref<6x4x32xf32, #tpu.memory_space<vmem>>, vector<1x4x32xf32>
    tpu.vector_store %arg5[%c0_12, %c0_13, %c0_14], %7 {strides = array<i32>} : memref<6x4x32xf32, #tpu.memory_space<vmem>>, vector<1x4x32xf32>,
    %cst_15 = arith.constant 0.000000e+00 : f32
    %9 = vector.broadcast %cst_15 : f32 to vector<1x4x32xf32>
    %c5_16 = arith.constant 5 : index
    %c0_17 = arith.constant 0 : index
    %c0_18 = arith.constant 0 : index
    %10 = vector.load %arg5[%c5_16, %c0_17, %c0_18] : memref<6x4x32xf32, #tpu.memory_space<vmem>>, vector<1x4x32xf32>
    tpu.vector_store %arg5[%c5_16, %c0_17, %c0_18], %9 {strides = array<i32>} : memref<6x4x32xf32, #tpu.memory_space<vmem>>, vector<1x4x32xf32>,
    %c0_19 = arith.constant 0 : index
    %c0_20 = arith.constant 0 : index
    %c0_21 = arith.constant 0 : index
    %11 = vector.load %arg4[%c0_19, %c0_20, %c0_21] : memref<4x6x32xf32, #tpu.memory_space<vmem>>, vector<4x4x32xf32>
    %c0_22 = arith.constant 0 : index
    %c1_23 = arith.constant 1 : index
    %c0_24 = arith.constant 0 : index
    %12 = vector.load %arg4[%c0_22, %c1_23, %c0_24] : memref<4x6x32xf32, #tpu.memory_space<vmem>>, vector<4x4x32xf32>
    %13 = arith.addf %11, %12 : vector<4x4x32xf32>
    %c0_25 = arith.constant 0 : index
    %c2 = arith.constant 2 : index
    %c0_26 = arith.constant 0 : index
    %14 = vector.load %arg4[%c0_25, %c2, %c0_26] : memref<4x6x32xf32, #tpu.memory_space<vmem>>, vector<4x4x32xf32>
    %15 = arith.addf %13, %14 : vector<4x4x32xf32>
    %c1_27 = arith.constant 1 : index
    %c0_28 = arith.constant 0 : index
    %c0_29 = arith.constant 0 : index
    %16 = vector.load %arg5[%c1_27, %c0_28, %c0_29] : memref<6x4x32xf32, #tpu.memory_space<vmem>>, vector<4x4x32xf32>
    tpu.vector_store %arg5[%c1_27, %c0_28, %c0_29], %15 {strides = array<i32>} : memref<6x4x32xf32, #tpu.memory_space<vmem>>, vector<4x4x32xf32>,
    %c0_30 = arith.constant 0 : index
    %c0_31 = arith.constant 0 : index
    %c0_32 = arith.constant 0 : index
    %17 = vector.load %arg5[%c0_30, %c0_31, %c0_32] : memref<6x4x32xf32, #tpu.memory_space<vmem>>, vector<4x4x32xf32>
    %c1_33 = arith.constant 1 : index
    %c0_34 = arith.constant 0 : index
    %c0_35 = arith.constant 0 : index
    %18 = vector.load %arg5[%c1_33, %c0_34, %c0_35] : memref<6x4x32xf32, #tpu.memory_space<vmem>>, vector<4x4x32xf32>
    %19 = arith.addf %17, %18 : vector<4x4x32xf32>
    %c2_36 = arith.constant 2 : index
    %c0_37 = arith.constant 0 : index
    %c0_38 = arith.constant 0 : index
    %20 = vector.load %arg5[%c2_36, %c0_37, %c0_38] : memref<6x4x32xf32, #tpu.memory_space<vmem>>, vector<4x4x32xf32>
    %21 = arith.addf %19, %20 : vector<4x4x32xf32>
    %cst_39 = arith.constant 0.111111112 : f32
    %22 = vector.broadcast %cst_39 : f32 to vector<4x4x32xf32>
    %23 = arith.mulf %21, %22 : vector<4x4x32xf32>
    %c0_40 = arith.constant 0 : index
    %c0_41 = arith.constant 0 : index
    %c0_42 = arith.constant 0 : index
    %c0_43 = arith.constant 0 : index
    %24 = vector.load %arg3[%c0_40, %c0_41, %c0_42, %c0_43] : memref<1x4x4x32xf32, #tpu.memory_space<vmem>>, vector<1x4x4x32xf32>
    %25 = vector.shape_cast %24 : vector<1x4x4x32xf32> to vector<4x4x32xf32>
    %26 = vector.shape_cast %23 : vector<4x4x32xf32> to vector<1x4x4x32xf32>
    tpu.vector_store %arg3[%c0_40, %c0_41, %c0_42, %c0_43], %26 {strides = array<i32>} : memref<1x4x4x32xf32, #tpu.memory_space<vmem>>, vector<1x4x4x32xf32>,
    return
  }
  func.func @transform_0(%arg0: i32, %arg1: i32) -> (i32, i32, i32, i32) {
    %c0_i32 = arith.constant 0 : i32
    %c0_i32_0 = arith.constant 0 : i32
    %c0_i32_1 = arith.constant 0 : i32
    return %arg0, %c0_i32, %c0_i32_0, %arg1 : i32, i32, i32, i32
  }
  func.func @transform_1(%arg0: i32, %arg1: i32) -> (i32, i32, i32, i32) {
    %c0_i32 = arith.constant 0 : i32
    %c0_i32_0 = arith.constant 0 : i32
    %c0_i32_1 = arith.constant 0 : i32
    return %arg0, %c0_i32, %c0_i32_0, %arg1 : i32, i32, i32, i32
  }
}

module attributes {stable_mosaic.version = 11 : i64} {
  func.func @_nn_min_kernel(%arg0: i32, %arg1: i32, %arg2: memref<128x128xbf16, #tpu.memory_space<vmem>>, %arg3: memref<256x128xbf16, #tpu.memory_space<vmem>>, %arg4: memref<256x1xf32, #tpu.memory_space<vmem>>, %arg5: memref<1x128xf32, #tpu.memory_space<vmem>>, %arg6: memref<1x128xi32, #tpu.memory_space<vmem>>) attributes {dimension_semantics = [#tpu.dimension_semantics<parallel>, #tpu.dimension_semantics<arbitrary>], iteration_bounds = array<i64: 1, 1>, scalar_prefetch = 0 : i64, scratch_operands = 0 : i64, tpu.core_type = #tpu.core_type<tc>, window_params = [{transform_indices = @transform_0, window_bounds = array<i64: 128, 128>}, {transform_indices = @transform_1, window_bounds = array<i64: 256, 128>}, {transform_indices = @transform_2, window_bounds = array<i64: 256, 1>}, {transform_indices = @transform_3, window_bounds = array<i64: 1, 128>}, {transform_indices = @transform_4, window_bounds = array<i64: 1, 128>}]} {
    %c0_i32 = arith.constant 0 : i32
    %0 = arith.cmpi eq, %arg1, %c0_i32 : i32
    %1 = arith.extui %0 : i1 to i32
    %c0_i32_0 = arith.constant 0 : i32
    %2 = arith.cmpi ne, %1, %c0_i32_0 : i32
    scf.if %2 {
      %cst_19 = arith.constant 0x7F800000 : f32
      %31 = vector.broadcast %cst_19 : f32 to vector<1x128xf32>
      %c0_20 = arith.constant 0 : index
      %c0_21 = arith.constant 0 : index
      %32 = vector.load %arg5[%c0_20, %c0_21] : memref<1x128xf32, #tpu.memory_space<vmem>>, vector<1x128xf32>
      tpu.vector_store %arg5[%c0_20, %c0_21], %31 {strides = array<i32>} : memref<1x128xf32, #tpu.memory_space<vmem>>, vector<1x128xf32>,
      %c0_i32_22 = arith.constant 0 : i32
      %33 = vector.broadcast %c0_i32_22 : i32 to vector<1x128xi32>
      %c0_23 = arith.constant 0 : index
      %c0_24 = arith.constant 0 : index
      %34 = vector.load %arg6[%c0_23, %c0_24] : memref<1x128xi32, #tpu.memory_space<vmem>>, vector<1x128xi32>
      tpu.vector_store %arg6[%c0_23, %c0_24], %33 {strides = array<i32>} : memref<1x128xi32, #tpu.memory_space<vmem>>, vector<1x128xi32>,
    } else {
    }
    %c0 = arith.constant 0 : index
    %c0_1 = arith.constant 0 : index
    %3 = vector.load %arg3[%c0, %c0_1] : memref<256x128xbf16, #tpu.memory_space<vmem>>, vector<256x128xbf16>
    %c0_2 = arith.constant 0 : index
    %c0_3 = arith.constant 0 : index
    %4 = vector.load %arg2[%c0_2, %c0_3] : memref<128x128xbf16, #tpu.memory_space<vmem>>, vector<128x128xbf16>
    %cst = arith.constant dense<0.000000e+00> : vector<256x128xf32>
    %5 = tpu.matmul %3, %4, %cst {dimension_numbers = #tpu.dot_dimension_numbers<[1], [1], [0], [0], [0, 0, 1, 0], [], []>} : vector<256x128xbf16>, vector<128x128xbf16>, vector<256x128xf32> -> vector<256x128xf32>
    %cst_4 = arith.constant -2.000000e+00 : f32
    %6 = vector.broadcast %cst_4 : f32 to vector<256x128xf32>
    %7 = arith.mulf %6, %5 : vector<256x128xf32>
    %c0_5 = arith.constant 0 : index
    %c0_6 = arith.constant 0 : index
    %8 = vector.load %arg4[%c0_5, %c0_6] : memref<256x1xf32, #tpu.memory_space<vmem>>, vector<256x1xf32>
    %9 = vector.broadcast %8 : vector<256x1xf32> to vector<256x128xf32>
    %10 = arith.addf %7, %9 : vector<256x128xf32>
    %cst_7 = arith.constant dense<0x7F800000> : vector<128xf32>
    %11 = vector.multi_reduction <minimumf>, %10, %cst_7 [0] : vector<256x128xf32> to vector<128xf32>
    %12 = vector.shape_cast %11 : vector<128xf32> to vector<1x128xf32>
    %13 = tpu.iota {dimensions = array<i32: 0>} : vector<256x128xi32>
    %14 = vector.broadcast %12 : vector<1x128xf32> to vector<256x128xf32>
    %15 = arith.cmpf oeq, %10, %14 : vector<256x128xf32>
    %c1073741824_i32 = arith.constant 1073741824 : i32
    %16 = vector.broadcast %c1073741824_i32 : i32 to vector<256x128xi32>
    %17 = arith.select %15, %13, %16 : vector<256x128xi1>, vector<256x128xi32>
    %cst_8 = arith.constant dense<2147483647> : vector<128xi32>
    %18 = vector.multi_reduction <minsi>, %17, %cst_8 [0] : vector<256x128xi32> to vector<128xi32>
    %19 = vector.shape_cast %18 : vector<128xi32> to vector<1x128xi32>
    %c256_i32 = arith.constant 256 : i32
    %20 = arith.muli %arg1, %c256_i32 : i32
    %21 = vector.broadcast %20 : i32 to vector<1x128xi32>
    %22 = arith.addi %19, %21 : vector<1x128xi32>
    %c0_9 = arith.constant 0 : index
    %c0_10 = arith.constant 0 : index
    %23 = vector.load %arg5[%c0_9, %c0_10] : memref<1x128xf32, #tpu.memory_space<vmem>>, vector<1x128xf32>
    %24 = arith.cmpf olt, %12, %23 : vector<1x128xf32>
    %c0_11 = arith.constant 0 : index
    %c0_12 = arith.constant 0 : index
    %25 = vector.load %arg6[%c0_11, %c0_12] : memref<1x128xi32, #tpu.memory_space<vmem>>, vector<1x128xi32>
    %26 = arith.select %24, %22, %25 : vector<1x128xi1>, vector<1x128xi32>
    %c0_13 = arith.constant 0 : index
    %c0_14 = arith.constant 0 : index
    %27 = vector.load %arg6[%c0_13, %c0_14] : memref<1x128xi32, #tpu.memory_space<vmem>>, vector<1x128xi32>
    tpu.vector_store %arg6[%c0_13, %c0_14], %26 {strides = array<i32>} : memref<1x128xi32, #tpu.memory_space<vmem>>, vector<1x128xi32>,
    %c0_15 = arith.constant 0 : index
    %c0_16 = arith.constant 0 : index
    %28 = vector.load %arg5[%c0_15, %c0_16] : memref<1x128xf32, #tpu.memory_space<vmem>>, vector<1x128xf32>
    %29 = arith.select %24, %12, %28 : vector<1x128xi1>, vector<1x128xf32>
    %c0_17 = arith.constant 0 : index
    %c0_18 = arith.constant 0 : index
    %30 = vector.load %arg5[%c0_17, %c0_18] : memref<1x128xf32, #tpu.memory_space<vmem>>, vector<1x128xf32>
    tpu.vector_store %arg5[%c0_17, %c0_18], %29 {strides = array<i32>} : memref<1x128xf32, #tpu.memory_space<vmem>>, vector<1x128xf32>,
    return
  }
  func.func @transform_0(%arg0: i32, %arg1: i32) -> (i32, i32) {
    %c0_i32 = arith.constant 0 : i32
    %c0_i32_0 = arith.constant 0 : i32
    return %arg0, %c0_i32 : i32, i32
  }
  func.func @transform_1(%arg0: i32, %arg1: i32) -> (i32, i32) {
    %c0_i32 = arith.constant 0 : i32
    %c0_i32_0 = arith.constant 0 : i32
    return %arg1, %c0_i32 : i32, i32
  }
  func.func @transform_2(%arg0: i32, %arg1: i32) -> (i32, i32) {
    %c0_i32 = arith.constant 0 : i32
    %c0_i32_0 = arith.constant 0 : i32
    return %arg1, %c0_i32 : i32, i32
  }
  func.func @transform_3(%arg0: i32, %arg1: i32) -> (i32, i32) {
    %c0_i32 = arith.constant 0 : i32
    %c0_i32_0 = arith.constant 0 : i32
    return %c0_i32, %arg0 : i32, i32
  }
  func.func @transform_4(%arg0: i32, %arg1: i32) -> (i32, i32) {
    %c0_i32 = arith.constant 0 : i32
    %c0_i32_0 = arith.constant 0 : i32
    return %c0_i32, %arg0 : i32, i32
  }
}

module attributes {stable_mosaic.version = 11 : i64} {
  func.func @_sqdist_kernel(%arg0: i32, %arg1: memref<2x128xbf16, #tpu.memory_space<vmem>>, %arg2: memref<2x1xf32, #tpu.memory_space<vmem>>, %arg3: memref<256x128xbf16, #tpu.memory_space<vmem>>, %arg4: memref<1x256xf32, #tpu.memory_space<vmem>>, %arg5: memref<2x256xf32, #tpu.memory_space<vmem>>) attributes {dimension_semantics = [#tpu.dimension_semantics<parallel>], iteration_bounds = array<i64: 1>, scalar_prefetch = 0 : i64, scratch_operands = 0 : i64, tpu.core_type = #tpu.core_type<tc>, window_params = [{pipeline_mode = #tpu.pipeline_mode<synchronous>, transform_indices = @transform_0, window_bounds = array<i64: 2, 128>}, {pipeline_mode = #tpu.pipeline_mode<synchronous>, transform_indices = @transform_1, window_bounds = array<i64: 2, 1>}, {transform_indices = @transform_2, window_bounds = array<i64: 256, 128>}, {transform_indices = @transform_3, window_bounds = array<i64: 1, 256>}, {transform_indices = @transform_4, window_bounds = array<i64: 2, 256>}]} {
    %c0 = arith.constant 0 : index
    %c0_0 = arith.constant 0 : index
    %0 = vector.load %arg2[%c0, %c0_0] : memref<2x1xf32, #tpu.memory_space<vmem>>, vector<2x1xf32>
    %c0_1 = arith.constant 0 : index
    %c0_2 = arith.constant 0 : index
    %1 = vector.load %arg1[%c0_1, %c0_2] : memref<2x128xbf16, #tpu.memory_space<vmem>>, vector<2x128xbf16>
    %c0_3 = arith.constant 0 : index
    %c0_4 = arith.constant 0 : index
    %2 = vector.load %arg3[%c0_3, %c0_4] : memref<256x128xbf16, #tpu.memory_space<vmem>>, vector<256x128xbf16>
    %cst = arith.constant dense<0.000000e+00> : vector<2x256xf32>
    %3 = tpu.matmul %1, %2, %cst {dimension_numbers = #tpu.dot_dimension_numbers<[1], [1], [0], [0], [0, 0, 1, 0], [], []>} : vector<2x128xbf16>, vector<256x128xbf16>, vector<2x256xf32> -> vector<2x256xf32>
    %cst_5 = arith.constant 2.000000e+00 : f32
    %4 = vector.broadcast %cst_5 : f32 to vector<2x256xf32>
    %5 = arith.mulf %4, %3 : vector<2x256xf32>
    %6 = vector.broadcast %0 : vector<2x1xf32> to vector<2x256xf32>
    %7 = arith.subf %6, %5 : vector<2x256xf32>
    %c0_6 = arith.constant 0 : index
    %c0_7 = arith.constant 0 : index
    %8 = vector.load %arg4[%c0_6, %c0_7] : memref<1x256xf32, #tpu.memory_space<vmem>>, vector<1x256xf32>
    %9 = vector.broadcast %8 : vector<1x256xf32> to vector<2x256xf32>
    %10 = arith.addf %7, %9 : vector<2x256xf32>
    %cst_8 = arith.constant 0.000000e+00 : f32
    %11 = vector.broadcast %cst_8 : f32 to vector<2x256xf32>
    %12 = arith.maximumf %10, %11 : vector<2x256xf32>
    %c0_9 = arith.constant 0 : index
    %c0_10 = arith.constant 0 : index
    %13 = vector.load %arg5[%c0_9, %c0_10] : memref<2x256xf32, #tpu.memory_space<vmem>>, vector<2x256xf32>
    tpu.vector_store %arg5[%c0_9, %c0_10], %12 {strides = array<i32>} : memref<2x256xf32, #tpu.memory_space<vmem>>, vector<2x256xf32>,
    return
  }
  func.func @transform_0(%arg0: i32) -> (i32, i32) {
    %c0_i32 = arith.constant 0 : i32
    %c0_i32_0 = arith.constant 0 : i32
    %c0_i32_1 = arith.constant 0 : i32
    return %c0_i32, %c0_i32_0 : i32, i32
  }
  func.func @transform_1(%arg0: i32) -> (i32, i32) {
    %c0_i32 = arith.constant 0 : i32
    %c0_i32_0 = arith.constant 0 : i32
    %c0_i32_1 = arith.constant 0 : i32
    return %c0_i32, %c0_i32_0 : i32, i32
  }
  func.func @transform_2(%arg0: i32) -> (i32, i32) {
    %c0_i32 = arith.constant 0 : i32
    %c0_i32_0 = arith.constant 0 : i32
    return %arg0, %c0_i32 : i32, i32
  }
  func.func @transform_3(%arg0: i32) -> (i32, i32) {
    %c0_i32 = arith.constant 0 : i32
    %c0_i32_0 = arith.constant 0 : i32
    return %c0_i32, %arg0 : i32, i32
  }
  func.func @transform_4(%arg0: i32) -> (i32, i32) {
    %c0_i32 = arith.constant 0 : i32
    %c0_i32_0 = arith.constant 0 : i32
    return %c0_i32, %arg0 : i32, i32
  }
}

module attributes {stable_mosaic.version = 11 : i64} {
  func.func @_blur_kernel(%arg0: i32, %arg1: memref<1x8x8xf32, #tpu.memory_space<vmem>>, %arg2: memref<32x8xf32, #tpu.memory_space<vmem>>, %arg3: memref<8x128xf32, #tpu.memory_space<vmem>>, %arg4: memref<1x32x128xf32, #tpu.memory_space<vmem>>) attributes {dimension_semantics = [#tpu.dimension_semantics<parallel>], iteration_bounds = array<i64: 2>, scalar_prefetch = 0 : i64, scratch_operands = 0 : i64, tpu.core_type = #tpu.core_type<tc>, window_params = [{transform_indices = @transform_0, window_bounds = array<i64: 1, 8, 8>}, {pipeline_mode = #tpu.pipeline_mode<synchronous>, transform_indices = @transform_1, window_bounds = array<i64: 32, 8>}, {pipeline_mode = #tpu.pipeline_mode<synchronous>, transform_indices = @transform_2, window_bounds = array<i64: 8, 128>}, {transform_indices = @transform_3, window_bounds = array<i64: 1, 32, 128>}]} {
    %c0 = arith.constant 0 : index
    %c0_0 = arith.constant 0 : index
    %c0_1 = arith.constant 0 : index
    %0 = vector.load %arg1[%c0, %c0_0, %c0_1] : memref<1x8x8xf32, #tpu.memory_space<vmem>>, vector<1x8x8xf32>
    %1 = vector.shape_cast %0 : vector<1x8x8xf32> to vector<8x8xf32>
    %c0_2 = arith.constant 0 : index
    %c0_3 = arith.constant 0 : index
    %2 = vector.load %arg3[%c0_2, %c0_3] : memref<8x128xf32, #tpu.memory_space<vmem>>, vector<8x128xf32>
    %cst = arith.constant dense<0.000000e+00> : vector<8x128xf32>
    %3 = tpu.matmul %1, %2, %cst {dimension_numbers = #tpu.dot_dimension_numbers<[1], [0], [0], [1], [0, 0, 1, 1], [], []>} : vector<8x8xf32>, vector<8x128xf32>, vector<8x128xf32> -> vector<8x128xf32>
    %c0_4 = arith.constant 0 : index
    %c0_5 = arith.constant 0 : index
    %4 = vector.load %arg2[%c0_4, %c0_5] : memref<32x8xf32, #tpu.memory_space<vmem>>, vector<32x8xf32>
    %cst_6 = arith.constant dense<0.000000e+00> : vector<32x128xf32>
    %5 = tpu.matmul %4, %3, %cst_6 {dimension_numbers = #tpu.dot_dimension_numbers<[1], [0], [0], [1], [0, 0, 1, 1], [], []>} : vector<32x8xf32>, vector<8x128xf32>, vector<32x128xf32> -> vector<32x128xf32>
    %c0_7 = arith.constant 0 : index
    %c0_8 = arith.constant 0 : index
    %c0_9 = arith.constant 0 : index
    %6 = vector.load %arg4[%c0_7, %c0_8, %c0_9] : memref<1x32x128xf32, #tpu.memory_space<vmem>>, vector<1x32x128xf32>
    %7 = vector.shape_cast %6 : vector<1x32x128xf32> to vector<32x128xf32>
    %8 = vector.shape_cast %5 : vector<32x128xf32> to vector<1x32x128xf32>
    tpu.vector_store %arg4[%c0_7, %c0_8, %c0_9], %8 {strides = array<i32>} : memref<1x32x128xf32, #tpu.memory_space<vmem>>, vector<1x32x128xf32>,
    return
  }
  func.func @transform_0(%arg0: i32) -> (i32, i32, i32) {
    %c0_i32 = arith.constant 0 : i32
    %c0_i32_0 = arith.constant 0 : i32
    %c0_i32_1 = arith.constant 0 : i32
    return %arg0, %c0_i32, %c0_i32_0 : i32, i32, i32
  }
  func.func @transform_1(%arg0: i32) -> (i32, i32) {
    %c0_i32 = arith.constant 0 : i32
    %c0_i32_0 = arith.constant 0 : i32
    %c0_i32_1 = arith.constant 0 : i32
    return %c0_i32, %c0_i32_0 : i32, i32
  }
  func.func @transform_2(%arg0: i32) -> (i32, i32) {
    %c0_i32 = arith.constant 0 : i32
    %c0_i32_0 = arith.constant 0 : i32
    %c0_i32_1 = arith.constant 0 : i32
    return %c0_i32, %c0_i32_0 : i32, i32
  }
  func.func @transform_3(%arg0: i32) -> (i32, i32, i32) {
    %c0_i32 = arith.constant 0 : i32
    %c0_i32_0 = arith.constant 0 : i32
    %c0_i32_1 = arith.constant 0 : i32
    return %arg0, %c0_i32, %c0_i32_0 : i32, i32, i32
  }
}

</mosaic_0001>

<llo_original>
// kernel: patchcore_forward.5
$region0: #{patchcore_forward.5}
  #allocation0 [shape = 'u32[]', space=smem, size = 0x4, offset = 0x4, fixed_abs, tag = 'smem constant byte address 0x4 - core index']
  #allocation1 [shape = 'u32[72,128]{1,0:T(1,128)}', space=vmem, size = 0x9000, scoped, tag = 'internal scratch']
  #allocation2 [shape = 'f32[8,10,16]{2,1,0:T(8,128)}', space=vmem, size = 0x10000, scoped, tag = 'scratch operand']
  #allocation3 [shape = 'f32[10,8,16]{2,1,0:T(8,128)}', space=vmem, size = 0xa000, scoped, tag = 'scratch operand']
  %s0 = inlined_call_operand.vmem [shape: f32[2,8,8,16], index: 0, kind: input, shape index: {}]
  %s1 = inlined_call_operand.vmem [shape: f32[2,8,8,16], index: 1, kind: output, shape index: {}]
  %s2 = sld [smem:[#allocation0]]
  $region37: #{patchcore_forward.5} parent=0
    _
  %s4 = ssub.s32 1, %s2
  %s5 = scalar_select 0, %s4, %s2
  loop: start=0, step=1, limit=4
  $region2: #{patchcore_forward.5} parent=0 // loop_pre_header
    _
  $region3: #{patchcore_forward.5} parent=0 // loop_header
    %s7 = sphi 0, %s11
    %p8 = scmp.ge.s32.totalorder %s7, 4
    %s14 = sphi 0, %s26
    %s15 = sphi 0, %s22
    %s16 = sphi 0, %s14
    %s17 = sphi 0, %s15
    %s18 = sphi 0, %s16
    %s19 = sphi 0, %s17
    %s31 = sphi 0, %s33
    %s34 = sphi 0, %s31
    %s35 = sphi 0, %s34
    %s51 = sphi 0, %s35
    %s59 = sphi 0, %s61
    %s62 = sphi 0, %s59
    %s63 = sphi 0, %s62
    %s79 = sphi 0, %s63
  $region4: #{patchcore_forward.5} parent=0 // loop_header_branch
    %10 = sbr.rel (%p8) target = $region8
  $region5: #{patchcore_forward.5} parent=0 // loop_body
    %s12 = ssub.s32 %s7, 1
    %s13 = ssub.s32 %s7, 2
    %s20 = sadd.s32 1, %s15
    %p21 = scmp.ge.s32.totalorder %s20, 1
    %s22 = scalar_select %p21, 0, %s20
    %s23 = sadd.s32 1, %s14
    %s24 = scalar_select %p21, %s23, %s14
    %p25 = scmp.ge.s32.totalorder %s24, 2
    %s26 = scalar_select %p25, 0, %s24
    %s27 = ssub.s32 %s14, %s26
    %s28 = ssub.s32 %s15, %s22
    %s29 = sor.u32 %s27, %s28
    %p30 = scmp.eq.s32.totalorder %s29, 0
    %s32 = sadd.s32 %s31, 1
    %s33 = scalar_select %p30, %s31, %s32
    %p36 = pneg %p30
    %p37 = scmp.eq.s32.totalorder %s7, 1
    %p38 = por %p36, %p37
    %p39 = scmp.ne.s32.totalorder %s31, %s34
    %p40 = scmp.eq.s32.totalorder %s7, 0
    %p41 = por %p39, %p40
    %p42 = scmp.ne.s32.totalorder %s31, %s34
    %p43 = scmp.eq.s32.totalorder %s12, 1
    %p44 = por %p42, %p43
    %p45 = scmp.ne.s32.totalorder %s34, %s35
    %p46 = scmp.eq.s32.totalorder %s12, 0
    %p47 = por %p45, %p46
    %p48 = scmp.ne.s32.totalorder %s34, %s35
    %p49 = scmp.eq.s32.totalorder %s13, 1
    %p50 = por %p48, %p49
    %p52 = scmp.ne.s32.totalorder %s35, %s51
    %p53 = scmp.eq.s32.totalorder %s13, 0
    %p54 = por %p52, %p53
    %s55 = ssub.s32 %s14, %s26
    %s56 = ssub.s32 %s15, %s22
    %s57 = sor.u32 %s55, %s56
    %p58 = scmp.eq.s32.totalorder %s57, 0
    %s60 = sadd.s32 %s59, 1
    %s61 = scalar_select %p58, %s59, %s60
    %p64 = pneg %p58
    %p65 = scmp.eq.s32.totalorder %s7, 1
    %p66 = por %p64, %p65
    %p67 = scmp.ne.s32.totalorder %s59, %s62
    %p68 = scmp.eq.s32.totalorder %s7, 0
    %p69 = por %p67, %p68
    %p70 = scmp.ne.s32.totalorder %s59, %s62
    %p71 = scmp.eq.s32.totalorder %s12, 1
    %p72 = por %p70, %p71
    %p73 = scmp.ne.s32.totalorder %s62, %s63
    %p74 = scmp.eq.s32.totalorder %s12, 0
    %p75 = por %p73, %p74
    %p76 = scmp.ne.s32.totalorder %s62, %s63
    %p77 = scmp.eq.s32.totalorder %s13, 1
    %p78 = por %p76, %p77
    %p80 = scmp.ne.s32.totalorder %s63, %s79
    %p81 = scmp.eq.s32.totalorder %s13, 0
    %p82 = por %p80, %p81
    %p83 = scmp.le.s32.totalorder 1, %s7
    %p84 = scmp.lt.s32.totalorder %s7, 3
    %p85 = pnand %p83, %p84
    %p86 = pneg %p85
    // Predicated region
    $region9: #{patchcore_forward.5} parent=5 // pred_check
      _
    $region10: #{patchcore_forward.5} parent=5 // pred_check_branch
      %88 = sbr.rel (%p85) target = $region12
    $region11: #{patchcore_forward.5} parent=5 // pred_region
      %s89 = ssub.s32 %s7, 1
    $region12: #{patchcore_forward.5} parent=5 // pred_fallthru
      _
    %p90 = scmp.lt.s32.totalorder %s7, 2
    // Predicated region
    $region13: #{patchcore_forward.5} parent=5 // pred_check
      %p91 = pneg %p90
    $region14: #{patchcore_forward.5} parent=5 // pred_check_branch
      %93 = sbr.rel (%p91) target = $region16
    $region15: #{patchcore_forward.5} parent=5 // pred_region
      // Predicated region
      $region17: #{patchcore_forward.5} parent=15 // pred_check
        %p94 = pneg %p41
      $region18: #{patchcore_forward.5} parent=15 // pred_check_branch
        %96 = sbr.rel (%p94) target = $region20
      $region19: #{patchcore_forward.5} parent=15 // pred_region
        %p97 = scmp.lt.s32.totalorder %s14, 1
        %s98 = scalar_select %p97, %s14, 1
        %p99 = scmp.lt.s32.totalorder %s15, 0
        %s100 = scalar_select %p99, %s15, 0
        %s101 = smul.addr %s98, 8
        %s102 = sadd.s32 %s100, %s101
        %s103 = smul.addr %s102, 8
        %s104 = scalar_lea.vmem %s0, %s103
      $region20: #{patchcore_forward.5} parent=15 // pred_fallthru
        _
    $region16: #{patchcore_forward.5} parent=5 // pred_fallthru
      _
    %p105 = scmp.le.s32.totalorder 1, %s7
    %p106 = scmp.lt.s32.totalorder %s7, 3
    %p107 = pnand %p105, %p106
    %p108 = pneg %p107
    // Predicated region
    $region21: #{patchcore_forward.5} parent=5 // pred_check
      _
    $region22: #{patchcore_forward.5} parent=5 // pred_check_branch
      %110 = sbr.rel (%p107) target = $region24
    $region23: #{patchcore_forward.5} parent=5 // pred_region
      %s111 = ssub.s32 %s7, 1
      %p112 = scmp.lt.s32.totalorder %s16, 1
      %s113 = scalar_select %p112, %s16, 1
      %p114 = scmp.lt.s32.totalorder %s17, 0
      %s115 = scalar_select %p114, %s17, 0
      %s116 = smul.addr %s113, 8
      %s117 = sadd.s32 %s115, %s116
      %s118 = smul.addr %s117, 8
      %s119 = scalar_lea.vmem %s0, %s118
      %p120 = pneg %p47
      %p121 = pneg %p44
      %p122 = pneg %p75
      %p123 = pneg %p72
      %p124 = scmp.lt.s32.totalorder %s16, 1
      %s125 = scalar_select %p124, %s16, 1
      %p126 = scmp.lt.s32.totalorder %s17, 0
      %s127 = scalar_select %p126, %s17, 0
      %s128 = smul.addr %s125, 8
      %s129 = sadd.s32 %s127, %s128
      %s130 = smul.addr %s129, 8
      %s131 = scalar_lea.vmem %s1, %s130
      %p132 = scmp.lt.s32.totalorder %s16, 1
      %s133 = scalar_select %p132, %s16, 1
      %p134 = scmp.lt.s32.totalorder %s17, 0
      %s135 = scalar_select %p134, %s17, 0
      %s136 = smul.addr %s133, 8
      %s137 = sadd.s32 %s135, %s136
      %s138 = smul.addr %s137, 8
      %s139 = scalar_lea.vmem %s0, %s138
      %p140 = scmp.lt.s32.totalorder %s16, 1
      %s141 = scalar_select %p140, %s16, 1
      %p142 = scmp.lt.s32.totalorder %s17, 0
      %s143 = scalar_select %p142, %s17, 0
      %s144 = smul.addr %s141, 8
      %s145 = sadd.s32 %s143, %s144
      %s146 = smul.addr %s145, 8
      %s147 = scalar_lea.vmem %s1, %s146
      %vm148 = vcmask 122880
      %149 = vst.msk [vmem:[#allocation2] sm:$0x1] %vm148, 0.0
      %150 = vst.msk [vmem:[#allocation2 + $0x10] sm:$0x1] %vm148, 0.0
      %151 = vst.msk [vmem:[#allocation2 + $0x20] sm:$0x1] %vm148, 0.0
      %152 = vst.msk [vmem:[#allocation2 + $0x30] sm:$0x1] %vm148, 0.0
      %153 = vst.msk [vmem:[#allocation2 + $0x40] sm:$0x1] %vm148, 0.0
      %154 = vst.msk [vmem:[#allocation2 + $0x50] sm:$0x1] %vm148, 0.0
      %155 = vst.msk [vmem:[#allocation2 + $0x60] sm:$0x1] %vm148, 0.0
      %156 = vst.msk [vmem:[#allocation2 + $0x70] sm:$0x1] %vm148, 0.0
      %157 = vst.msk [vmem:[#allocation2 + $0x9] sm:$0x1] %vm148, 0.0
      %158 = vst.msk [vmem:[#allocation2 + $0x19] sm:$0x1] %vm148, 0.0
      %159 = vst.msk [vmem:[#allocation2 + $0x29] sm:$0x1] %vm148, 0.0
      %160 = vst.msk [vmem:[#allocation2 + $0x39] sm:$0x1] %vm148, 0.0
      %161 = vst.msk [vmem:[#allocation2 + $0x49] sm:$0x1] %vm148, 0.0
      %162 = vst.msk [vmem:[#allocation2 + $0x59] sm:$0x1] %vm148, 0.0
      %163 = vst.msk [vmem:[#allocation2 + $0x69] sm:$0x1] %vm148, 0.0
      %164 = vst.msk [vmem:[#allocation2 + $0x79] sm:$0x1] %vm148, 0.0
      %v165 = vld [vmem:[%s139] sm:$0xff]
      %v166 = vld [vmem:[%s139 + $0x8] sm:$0xff]
      %v167 = vld [vmem:[%s139 + $0x10] sm:$0xff]
      %v168 = vld [vmem:[%s139 + $0x18] sm:$0xff]
      %v169 = vld [vmem:[%s139 + $0x20] sm:$0xff]
      %v170 = vld [vmem:[%s139 + $0x28] sm:$0xff]
      %v171 = vld [vmem:[%s139 + $0x30] sm:$0xff]
      %v172 = vld [vmem:[%s139 + $0x38] sm:$0xff]
      %vm173 = vcmask 130048
      %174 = vst.msk [vmem:[#allocation2 + $0x1] sm:$0xff] %vm173, %v165
      %175 = vst.msk [vmem:[#allocation2 + $0x11] sm:$0xff] %vm173, %v166
      %176 = vst.msk [vmem:[#allocation2 + $0x21] sm:$0xff] %vm173, %v167
      %177 = vst.msk [vmem:[#allocation2 + $0x31] sm:$0xff] %vm173, %v168
      %178 = vst.msk [vmem:[#allocation2 + $0x41] sm:$0xff] %vm173, %v169
      %179 = vst.msk [vmem:[#allocation2 + $0x51] sm:$0xff] %vm173, %v170
      %180 = vst.msk [vmem:[#allocation2 + $0x61] sm:$0xff] %vm173, %v171
      %181 = vst.msk [vmem:[#allocation2 + $0x71] sm:$0xff] %vm173, %v172
      %182 = vst.msk [vmem:[#allocation3] sm:$0xff] %vm173, 0.0
      %s183 = scalar_lea.vmem [#allocation3], 72
      %184 = vst.msk [vmem:[%s183] sm:$0xff] %vm173, 0.0
      %v185 = vld [vmem:[#allocation2] sm:$0xff]
      %v186 = vld [vmem:[#allocation2 + $0x10] sm:$0xff]
      %v187 = vld [vmem:[#allocation2 + $0x20] sm:$0xff]
      %v188 = vld [vmem:[#allocation2 + $0x30] sm:$0xff]
      %v189 = vld [vmem:[#allocation2 + $0x40] sm:$0xff]
      %v190 = vld [vmem:[#allocation2 + $0x50] sm:$0xff]
      %v191 = vld [vmem:[#allocation2 + $0x60] sm:$0xff]
      %v192 = vld [vmem:[#allocation2 + $0x70] sm:$0xff]
      %v193 = vld [vmem:[#allocation2 + $0x1] sm:$0xff]
      %v194 = vld [vmem:[#allocation2 + $0x11] sm:$0xff]
      %v195 = vld [vmem:[#allocation2 + $0x21] sm:$0xff]
      %v196 = vld [vmem:[#allocation2 + $0x31] sm:$0xff]
      %v197 = vld [vmem:[#allocation2 + $0x41] sm:$0xff]
      %v198 = vld [vmem:[#allocation2 + $0x51] sm:$0xff]
      %v199 = vld [vmem:[#allocation2 + $0x61] sm:$0xff]
      %v200 = vld [vmem:[#allocation2 + $0x71] sm:$0xff]
      %v201 = vadd.f32 %v185, %v193
      %v202 = vadd.f32 %v186, %v194
      %v203 = vadd.f32 %v187, %v195
      %v204 = vadd.f32 %v188, %v196
      %v205 = vadd.f32 %v189, %v197
      %v206 = vadd.f32 %v190, %v198
      %v207 = vadd.f32 %v191, %v199
      %v208 = vadd.f32 %v192, %v200
      %v209 = vld [vmem:[#allocation2 + $0x2] sm:$0xff]
      %v210 = vld [vmem:[#allocation2 + $0x12] sm:$0xff]
      %v211 = vld [vmem:[#allocation2 + $0x22] sm:$0xff]
      %v212 = vld [vmem:[#allocation2 + $0x32] sm:$0xff]
      %v213 = vld [vmem:[#allocation2 + $0x42] sm:$0xff]
      %v214 = vld [vmem:[#allocation2 + $0x52] sm:$0xff]
      %v215 = vld [vmem:[#allocation2 + $0x62] sm:$0xff]
      %v216 = vld [vmem:[#allocation2 + $0x72] sm:$0xff]
      %v217 = vadd.f32 %v201, %v209
      %v218 = vadd.f32 %v202, %v210
      %v219 = vadd.f32 %v203, %v211
      %v220 = vadd.f32 %v204, %v212
      %v221 = vadd.f32 %v205, %v213
      %v222 = vadd.f32 %v206, %v214
      %v223 = vadd.f32 %v207, %v215
      %v224 = vadd.f32 %v208, %v216
      %s225 = scalar_lea.vmem [#allocation3], 8
      %226 = vst.msk [vmem:[%s225] sm:$0xff] %vm173, %v217
      %227 = vst.msk [vmem:[%s225 + $0x8] sm:$0xff] %vm173, %v218
      %228 = vst.msk [vmem:[%s225 + $0x10] sm:$0xff] %vm173, %v219
      %229 = vst.msk [vmem:[%s225 + $0x18] sm:$0xff] %vm173, %v220
      %230 = vst.msk [vmem:[%s225 + $0x20] sm:$0xff] %vm173, %v221
      %231 = vst.msk [vmem:[%s225 + $0x28] sm:$0xff] %vm173, %v222
      %232 = vst.msk [vmem:[%s225 + $0x30] sm:$0xff] %vm173, %v223
      %233 = vst.msk [vmem:[%s225 + $0x38] sm:$0xff] %vm173, %v224
      %v234 = vld [vmem:[#allocation3] sm:$0xff]
      %v235 = vld [vmem:[#allocation3 + $0x8] sm:$0xff]
      %v236 = vld [vmem:[#allocation3 + $0x10] sm:$0xff]
      %v237 = vld [vmem:[#allocation3 + $0x18] sm:$0xff]
      %v238 = vld [vmem:[#allocation3 + $0x20] sm:$0xff]
      %v239 = vld [vmem:[#allocation3 + $0x28] sm:$0xff]
      %v240 = vld [vmem:[#allocation3 + $0x30] sm:$0xff]
      %v241 = vld [vmem:[#allocation3 + $0x38] sm:$0xff]
      %v242 = vld [vmem:[%s225] sm:$0xff]
      %v243 = vld [vmem:[%s225 + $0x8] sm:$0xff]
      %v244 = vld [vmem:[%s225 + $0x10] sm:$0xff]
      %v245 = vld [vmem:[%s225 + $0x18] sm:$0xff]
      %v246 = vld [vmem:[%s225 + $0x20] sm:$0xff]
      %v247 = vld [vmem:[%s225 + $0x28] sm:$0xff]
      %v248 = vld [vmem:[%s225 + $0x30] sm:$0xff]
      %v249 = vld [vmem:[%s225 + $0x38] sm:$0xff]
      %v250 = vadd.f32 %v234, %v242
      %v251 = vadd.f32 %v235, %v243
      %v252 = vadd.f32 %v236, %v244
      %v253 = vadd.f32 %v237, %v245
      %v254 = vadd.f32 %v238, %v246
      %v255 = vadd.f32 %v239, %v247
      %v256 = vadd.f32 %v240, %v248
      %v257 = vadd.f32 %v241, %v249
      %s258 = scalar_lea.vmem [#allocation3], 16
      %v259 = vld [vmem:[%s258] sm:$0xff]
      %v260 = vld [vmem:[%s258 + $0x8] sm:$0xff]
      %v261 = vld [vmem:[%s258 + $0x10] sm:$0xff]
      %v262 = vld [vmem:[%s258 + $0x18] sm:$0xff]
      %v263 = vld [vmem:[%s258 + $0x20] sm:$0xff]
      %v264 = vld [vmem:[%s258 + $0x28] sm:$0xff]
      %v265 = vld [vmem:[%s258 + $0x30] sm:$0xff]
      %v266 = vld [vmem:[%s258 + $0x38] sm:$0xff]
      %v267 = vadd.f32 %v250, %v259
      %v268 = vadd.f32 %v251, %v260
      %v269 = vadd.f32 %v252, %v261
      %v270 = vadd.f32 %v253, %v262
      %v271 = vadd.f32 %v254, %v263
      %v272 = vadd.f32 %v255, %v264
      %v273 = vadd.f32 %v256, %v265
      %v274 = vadd.f32 %v257, %v266
      %v275 = vmul.f32 %v267, 0.11111111
      %v276 = vmul.f32 %v268, 0.11111111
      %v277 = vmul.f32 %v269, 0.11111111
      %v278 = vmul.f32 %v270, 0.11111111
      %v279 = vmul.f32 %v271, 0.11111111
      %v280 = vmul.f32 %v272, 0.11111111
      %v281 = vmul.f32 %v273, 0.11111111
      %v282 = vmul.f32 %v274, 0.11111111
      %283 = vst.msk [vmem:[%s147] sm:$0xff] %vm173, %v275
      %284 = vst.msk [vmem:[%s147 + $0x8] sm:$0xff] %vm173, %v276
      %285 = vst.msk [vmem:[%s147 + $0x10] sm:$0xff] %vm173, %v277
      %286 = vst.msk [vmem:[%s147 + $0x18] sm:$0xff] %vm173, %v278
      %287 = vst.msk [vmem:[%s147 + $0x20] sm:$0xff] %vm173, %v279
      %288 = vst.msk [vmem:[%s147 + $0x28] sm:$0xff] %vm173, %v280
      %289 = vst.msk [vmem:[%s147 + $0x30] sm:$0xff] %vm173, %v281
      %290 = vst.msk [vmem:[%s147 + $0x38] sm:$0xff] %vm173, %v282
      %p291 = scmp.lt.s32.totalorder %s16, 1
      %s292 = scalar_select %p291, %s16, 1
      %p293 = scmp.lt.s32.totalorder %s17, 0
      %s294 = scalar_select %p293, %s17, 0
      %s295 = smul.addr %s292, 8
      %s296 = sadd.s32 %s294, %s295
      %s297 = smul.addr %s296, 8
      %s298 = scalar_lea.vmem %s1, %s297
      // Predicated region
      $region25: #{patchcore_forward.5} parent=23 // pred_check
        %p299 = pneg %p72
      $region26: #{patchcore_forward.5} parent=23 // pred_check_branch
        %301 = sbr.rel (%p299) target = $region28
      $region27: #{patchcore_forward.5} parent=23 // pred_region
        _
      $region28: #{patchcore_forward.5} parent=23 // pred_fallthru
        _
    $region24: #{patchcore_forward.5} parent=5 // pred_fallthru
      _
    %p302 = scmp.le.s32.totalorder 2, %s7
    // Predicated region
    $region29: #{patchcore_forward.5} parent=5 // pred_check
      %p303 = pneg %p302
    $region30: #{patchcore_forward.5} parent=5 // pred_check_branch
      %305 = sbr.rel (%p303) target = $region32
    $region31: #{patchcore_forward.5} parent=5 // pred_region
      %s306 = ssub.s32 %s7, 2
      // Predicated region
      $region33: #{patchcore_forward.5} parent=31 // pred_check
        %p307 = pneg %p78
      $region34: #{patchcore_forward.5} parent=31 // pred_check_branch
        %309 = sbr.rel (%p307) target = $region36
      $region35: #{patchcore_forward.5} parent=31 // pred_region
        %p310 = scmp.lt.s32.totalorder %s18, 1
        %s311 = scalar_select %p310, %s18, 1
        %p312 = scmp.lt.s32.totalorder %s19, 0
        %s313 = scalar_select %p312, %s19, 0
        %s314 = smul.addr %s311, 8
        %s315 = sadd.s32 %s313, %s314
        %s316 = smul.addr %s315, 8
        %s317 = scalar_lea.vmem %s1, %s316
      $region36: #{patchcore_forward.5} parent=31 // pred_fallthru
        _
    $region32: #{patchcore_forward.5} parent=5 // pred_fallthru
      _
  $region6: #{patchcore_forward.5} parent=0 // loop_footer
    %s11 = sadd.s32 1, %s7
  $region7: #{patchcore_forward.5} parent=0 // loop_footer_branch
    %6 = sbr.rel target = $region3
  $region8: #{patchcore_forward.5} parent=0 // loop_exit
    _

// kernel: patchcore_forward.6
$region0: #{patchcore_forward.6}
  #allocation0 [shape = 'u32[]', space=smem, size = 0x4, offset = 0x4, fixed_abs, tag = 'smem constant byte address 0x4 - core index']
  #allocation1 [shape = 'u32[72,128]{1,0:T(1,128)}', space=vmem, size = 0x9000, scoped, tag = 'internal scratch']
  #allocation2 [shape = 'f32[4,6,32]{2,1,0:T(8,128)}', space=vmem, size = 0x4000, scoped, tag = 'scratch operand']
  #allocation3 [shape = 'f32[6,4,32]{2,1,0:T(4,128)}', space=vmem, size = 0x3000, scoped, tag = 'scratch operand']
  %s0 = inlined_call_operand.vmem [shape: f32[2,4,4,32], index: 0, kind: input, shape index: {}]
  %s1 = inlined_call_operand.vmem [shape: f32[2,4,4,32], index: 1, kind: output, shape index: {}]
  %s2 = sld [smem:[#allocation0]]
  $region37: #{patchcore_forward.6} parent=0
    _
  %s4 = ssub.s32 1, %s2
  %s5 = scalar_select 0, %s4, %s2
  loop: start=0, step=1, limit=4
  $region2: #{patchcore_forward.6} parent=0 // loop_pre_header
    _
  $region3: #{patchcore_forward.6} parent=0 // loop_header
    %s7 = sphi 0, %s11
    %p8 = scmp.ge.s32.totalorder %s7, 4
    %s14 = sphi 0, %s26
    %s15 = sphi 0, %s22
    %s16 = sphi 0, %s14
    %s17 = sphi 0, %s15
    %s18 = sphi 0, %s16
    %s19 = sphi 0, %s17
    %s31 = sphi 0, %s33
    %s34 = sphi 0, %s31
    %s35 = sphi 0, %s34
    %s51 = sphi 0, %s35
    %s59 = sphi 0, %s61
    %s62 = sphi 0, %s59
    %s63 = sphi 0, %s62
    %s79 = sphi 0, %s63
  $region4: #{patchcore_forward.6} parent=0 // loop_header_branch
    %10 = sbr.rel (%p8) target = $region8
  $region5: #{patchcore_forward.6} parent=0 // loop_body
    %s12 = ssub.s32 %s7, 1
    %s13 = ssub.s32 %s7, 2
    %s20 = sadd.s32 1, %s15
    %p21 = scmp.ge.s32.totalorder %s20, 1
    %s22 = scalar_select %p21, 0, %s20
    %s23 = sadd.s32 1, %s14
    %s24 = scalar_select %p21, %s23, %s14
    %p25 = scmp.ge.s32.totalorder %s24, 2
    %s26 = scalar_select %p25, 0, %s24
    %s27 = ssub.s32 %s14, %s26
    %s28 = ssub.s32 %s15, %s22
    %s29 = sor.u32 %s27, %s28
    %p30 = scmp.eq.s32.totalorder %s29, 0
    %s32 = sadd.s32 %s31, 1
    %s33 = scalar_select %p30, %s31, %s32
    %p36 = pneg %p30
    %p37 = scmp.eq.s32.totalorder %s7, 1
    %p38 = por %p36, %p37
    %p39 = scmp.ne.s32.totalorder %s31, %s34
    %p40 = scmp.eq.s32.totalorder %s7, 0
    %p41 = por %p39, %p40
    %p42 = scmp.ne.s32.totalorder %s31, %s34
    %p43 = scmp.eq.s32.totalorder %s12, 1
    %p44 = por %p42, %p43
    %p45 = scmp.ne.s32.totalorder %s34, %s35
    %p46 = scmp.eq.s32.totalorder %s12, 0
    %p47 = por %p45, %p46
    %p48 = scmp.ne.s32.totalorder %s34, %s35
    %p49 = scmp.eq.s32.totalorder %s13, 1
    %p50 = por %p48, %p49
    %p52 = scmp.ne.s32.totalorder %s35, %s51
    %p53 = scmp.eq.s32.totalorder %s13, 0
    %p54 = por %p52, %p53
    %s55 = ssub.s32 %s14, %s26
    %s56 = ssub.s32 %s15, %s22
    %s57 = sor.u32 %s55, %s56
    %p58 = scmp.eq.s32.totalorder %s57, 0
    %s60 = sadd.s32 %s59, 1
    %s61 = scalar_select %p58, %s59, %s60
    %p64 = pneg %p58
    %p65 = scmp.eq.s32.totalorder %s7, 1
    %p66 = por %p64, %p65
    %p67 = scmp.ne.s32.totalorder %s59, %s62
    %p68 = scmp.eq.s32.totalorder %s7, 0
    %p69 = por %p67, %p68
    %p70 = scmp.ne.s32.totalorder %s59, %s62
    %p71 = scmp.eq.s32.totalorder %s12, 1
    %p72 = por %p70, %p71
    %p73 = scmp.ne.s32.totalorder %s62, %s63
    %p74 = scmp.eq.s32.totalorder %s12, 0
    %p75 = por %p73, %p74
    %p76 = scmp.ne.s32.totalorder %s62, %s63
    %p77 = scmp.eq.s32.totalorder %s13, 1
    %p78 = por %p76, %p77
    %p80 = scmp.ne.s32.totalorder %s63, %s79
    %p81 = scmp.eq.s32.totalorder %s13, 0
    %p82 = por %p80, %p81
    %p83 = scmp.le.s32.totalorder 1, %s7
    %p84 = scmp.lt.s32.totalorder %s7, 3
    %p85 = pnand %p83, %p84
    %p86 = pneg %p85
    // Predicated region
    $region9: #{patchcore_forward.6} parent=5 // pred_check
      _
    $region10: #{patchcore_forward.6} parent=5 // pred_check_branch
      %88 = sbr.rel (%p85) target = $region12
    $region11: #{patchcore_forward.6} parent=5 // pred_region
      %s89 = ssub.s32 %s7, 1
    $region12: #{patchcore_forward.6} parent=5 // pred_fallthru
      _
    %p90 = scmp.lt.s32.totalorder %s7, 2
    // Predicated region
    $region13: #{patchcore_forward.6} parent=5 // pred_check
      %p91 = pneg %p90
    $region14: #{patchcore_forward.6} parent=5 // pred_check_branch
      %93 = sbr.rel (%p91) target = $region16
    $region15: #{patchcore_forward.6} parent=5 // pred_region
      // Predicated region
      $region17: #{patchcore_forward.6} parent=15 // pred_check
        %p94 = pneg %p41
      $region18: #{patchcore_forward.6} parent=15 // pred_check_branch
        %96 = sbr.rel (%p94) target = $region20
      $region19: #{patchcore_forward.6} parent=15 // pred_region
        %p97 = scmp.lt.s32.totalorder %s14, 1
        %s98 = scalar_select %p97, %s14, 1
        %p99 = scmp.lt.s32.totalorder %s15, 0
        %s100 = scalar_select %p99, %s15, 0
        %s101 = smul.addr %s98, 4
        %s102 = sadd.s32 %s100, %s101
        %s103 = smul.addr %s102, 4
        %s104 = scalar_lea.vmem %s0, %s103
      $region20: #{patchcore_forward.6} parent=15 // pred_fallthru
        _
    $region16: #{patchcore_forward.6} parent=5 // pred_fallthru
      _
    %p105 = scmp.le.s32.totalorder 1, %s7
    %p106 = scmp.lt.s32.totalorder %s7, 3
    %p107 = pnand %p105, %p106
    %p108 = pneg %p107
    // Predicated region
    $region21: #{patchcore_forward.6} parent=5 // pred_check
      _
    $region22: #{patchcore_forward.6} parent=5 // pred_check_branch
      %110 = sbr.rel (%p107) target = $region24
    $region23: #{patchcore_forward.6} parent=5 // pred_region
      %s111 = ssub.s32 %s7, 1
      %p112 = scmp.lt.s32.totalorder %s16, 1
      %s113 = scalar_select %p112, %s16, 1
      %p114 = scmp.lt.s32.totalorder %s17, 0
      %s115 = scalar_select %p114, %s17, 0
      %s116 = smul.addr %s113, 4
      %s117 = sadd.s32 %s115, %s116
      %s118 = smul.addr %s117, 4
      %s119 = scalar_lea.vmem %s0, %s118
      %p120 = pneg %p47
      %p121 = pneg %p44
      %p122 = pneg %p75
      %p123 = pneg %p72
      %p124 = scmp.lt.s32.totalorder %s16, 1
      %s125 = scalar_select %p124, %s16, 1
      %p126 = scmp.lt.s32.totalorder %s17, 0
      %s127 = scalar_select %p126, %s17, 0
      %s128 = smul.addr %s125, 4
      %s129 = sadd.s32 %s127, %s128
      %s130 = smul.addr %s129, 4
      %s131 = scalar_lea.vmem %s1, %s130
      %p132 = scmp.lt.s32.totalorder %s16, 1
      %s133 = scalar_select %p132, %s16, 1
      %p134 = scmp.lt.s32.totalorder %s17, 0
      %s135 = scalar_select %p134, %s17, 0
      %s136 = smul.addr %s133, 4
      %s137 = sadd.s32 %s135, %s136
      %s138 = smul.addr %s137, 4
      %s139 = scalar_lea.vmem %s0, %s138
      %p140 = scmp.lt.s32.totalorder %s16, 1
      %s141 = scalar_select %p140, %s16, 1
      %p142 = scmp.lt.s32.totalorder %s17, 0
      %s143 = scalar_select %p142, %s17, 0
      %s144 = smul.addr %s141, 4
      %s145 = sadd.s32 %s143, %s144
      %s146 = smul.addr %s145, 4
      %s147 = scalar_lea.vmem %s1, %s146
      %vm148 = vcmask 253952
      %149 = vst.msk [vmem:[#allocation2] sm:$0x1] %vm148, 0.0
      %150 = vst.msk [vmem:[#allocation2 + $0x8] sm:$0x1] %vm148, 0.0
      %151 = vst.msk [vmem:[#allocation2 + $0x10] sm:$0x1] %vm148, 0.0
      %152 = vst.msk [vmem:[#allocation2 + $0x18] sm:$0x1] %vm148, 0.0
      %153 = vst.msk [vmem:[#allocation2 + $0x5] sm:$0x1] %vm148, 0.0
      %154 = vst.msk [vmem:[#allocation2 + $0xd] sm:$0x1] %vm148, 0.0
      %155 = vst.msk [vmem:[#allocation2 + $0x15] sm:$0x1] %vm148, 0.0
      %156 = vst.msk [vmem:[#allocation2 + $0x1d] sm:$0x1] %vm148, 0.0
      %v157 = vld [vmem:[%s139] sm:$0xf]
      %v158 = vld [vmem:[%s139 + $0x4] sm:$0xf]
      %v159 = vld [vmem:[%s139 + $0x8] sm:$0xf]
      %v160 = vld [vmem:[%s139 + $0xc] sm:$0xf]
      %vm161 = vcmask 257024
      %162 = vst.msk [vmem:[#allocation2 + $0x1] sm:$0xf] %vm161, %v157
      %163 = vst.msk [vmem:[#allocation2 + $0x9] sm:$0xf] %vm161, %v158
      %164 = vst.msk [vmem:[#allocation2 + $0x11] sm:$0xf] %vm161, %v159
      %165 = vst.msk [vmem:[#allocation2 + $0x19] sm:$0xf] %vm161, %v160
      %166 = vst.msk [vmem:[#allocation3] sm:$0xf] %vm161, 0.0
      %s167 = scalar_lea.vmem [#allocation3], 20
      %168 = vst.msk [vmem:[%s167] sm:$0xf] %vm161, 0.0
      %v169 = vld [vmem:[#allocation2] sm:$0xf]
      %v170 = vld [vmem:[#allocation2 + $0x8] sm:$0xf]
      %v171 = vld [vmem:[#allocation2 + $0x10] sm:$0xf]
      %v172 = vld [vmem:[#allocation2 + $0x18] sm:$0xf]
      %v173 = vld [vmem:[#allocation2 + $0x1] sm:$0xf]
      %v174 = vld [vmem:[#allocation2 + $0x9] sm:$0xf]
      %v175 = vld [vmem:[#allocation2 + $0x11] sm:$0xf]
      %v176 = vld [vmem:[#allocation2 + $0x19] sm:$0xf]
      %v177 = vadd.f32 %v169, %v173
      %v178 = vadd.f32 %v170, %v174
      %v179 = vadd.f32 %v171, %v175
      %v180 = vadd.f32 %v172, %v176
      %v181 = vld [vmem:[#allocation2 + $0x2] sm:$0xf]
      %v182 = vld [vmem:[#allocation2 + $0xa] sm:$0xf]
      %v183 = vld [vmem:[#allocation2 + $0x12] sm:$0xf]
      %v184 = vld [vmem:[#allocation2 + $0x1a] sm:$0xf]
      %v185 = vadd.f32 %v177, %v181
      %v186 = vadd.f32 %v178, %v182
      %v187 = vadd.f32 %v179, %v183
      %v188 = vadd.f32 %v180, %v184
      %s189 = scalar_lea.vmem [#allocation3], 4
      %190 = vst.msk [vmem:[%s189] sm:$0xf] %vm161, %v185
      %191 = vst.msk [vmem:[%s189 + $0x4] sm:$0xf] %vm161, %v186
      %192 = vst.msk [vmem:[%s189 + $0x8] sm:$0xf] %vm161, %v187
      %193 = vst.msk [vmem:[%s189 + $0xc] sm:$0xf] %vm161, %v188
      %v194 = vld [vmem:[#allocation3] sm:$0xf]
      %v195 = vld [vmem:[#allocation3 + $0x4] sm:$0xf]
      %v196 = vld [vmem:[#allocation3 + $0x8] sm:$0xf]
      %v197 = vld [vmem:[#allocation3 + $0xc] sm:$0xf]
      %v198 = vld [vmem:[%s189] sm:$0xf]
      %v199 = vld [vmem:[%s189 + $0x4] sm:$0xf]
      %v200 = vld [vmem:[%s189 + $0x8] sm:$0xf]
      %v201 = vld [vmem:[%s189 + $0xc] sm:$0xf]
      %v202 = vadd.f32 %v194, %v198
      %v203 = vadd.f32 %v195, %v199
      %v204 = vadd.f32 %v196, %v200
      %v205 = vadd.f32 %v197, %v201
      %s206 = scalar_lea.vmem [#allocation3], 8
      %v207 = vld [vmem:[%s206] sm:$0xf]
      %v208 = vld [vmem:[%s206 + $0x4] sm:$0xf]
      %v209 = vld [vmem:[%s206 + $0x8] sm:$0xf]
      %v210 = vld [vmem:[%s206 + $0xc] sm:$0xf]
      %v211 = vadd.f32 %v202, %v207
      %v212 = vadd.f32 %v203, %v208
      %v213 = vadd.f32 %v204, %v209
      %v214 = vadd.f32 %v205, %v210
      %v215 = vmul.f32 %v211, 0.11111111
      %v216 = vmul.f32 %v212, 0.11111111
      %v217 = vmul.f32 %v213, 0.11111111
      %v218 = vmul.f32 %v214, 0.11111111
      %219 = vst.msk [vmem:[%s147] sm:$0xf] %vm161, %v215
      %220 = vst.msk [vmem:[%s147 + $0x4] sm:$0xf] %vm161, %v216
      %221 = vst.msk [vmem:[%s147 + $0x8] sm:$0xf] %vm161, %v217
      %222 = vst.msk [vmem:[%s147 + $0xc] sm:$0xf] %vm161, %v218
      %p223 = scmp.lt.s32.totalorder %s16, 1
      %s224 = scalar_select %p223, %s16, 1
      %p225 = scmp.lt.s32.totalorder %s17, 0
      %s226 = scalar_select %p225, %s17, 0
      %s227 = smul.addr %s224, 4
      %s228 = sadd.s32 %s226, %s227
      %s229 = smul.addr %s228, 4
      %s230 = scalar_lea.vmem %s1, %s229
      // Predicated region
      $region25: #{patchcore_forward.6} parent=23 // pred_check
        %p231 = pneg %p72
      $region26: #{patchcore_forward.6} parent=23 // pred_check_branch
        %233 = sbr.rel (%p231) target = $region28
      $region27: #{patchcore_forward.6} parent=23 // pred_region
        _
      $region28: #{patchcore_forward.6} parent=23 // pred_fallthru
        _
    $region24: #{patchcore_forward.6} parent=5 // pred_fallthru
      _
    %p234 = scmp.le.s32.totalorder 2, %s7
    // Predicated region
    $region29: #{patchcore_forward.6} parent=5 // pred_check
      %p235 = pneg %p234
    $region30: #{patchcore_forward.6} parent=5 // pred_check_branch
      %237 = sbr.rel (%p235) target = $region32
    $region31: #{patchcore_forward.6} parent=5 // pred_region
      %s238 = ssub.s32 %s7, 2
      // Predicated region
      $region33: #{patchcore_forward.6} parent=31 // pred_check
        %p239 = pneg %p78
      $region34: #{patchcore_forward.6} parent=31 // pred_check_branch
        %241 = sbr.rel (%p239) target = $region36
      $region35: #{patchcore_forward.6} parent=31 // pred_region
        %p242 = scmp.lt.s32.totalorder %s18, 1
        %s243 = scalar_select %p242, %s18, 1
        %p244 = scmp.lt.s32.totalorder %s19, 0
        %s245 = scalar_select %p244, %s19, 0
        %s246 = smul.addr %s243, 4
        %s247 = sadd.s32 %s245, %s246
        %s248 = smul.addr %s247, 4
        %s249 = scalar_lea.vmem %s1, %s248
      $region36: #{patchcore_forward.6} parent=31 // pred_fallthru
        _
    $region32: #{patchcore_forward.6} parent=5 // pred_fallthru
      _
  $region6: #{patchcore_forward.6} parent=0 // loop_footer
    %s11 = sadd.s32 1, %s7
  $region7: #{patchcore_forward.6} parent=0 // loop_footer_branch
    %6 = sbr.rel target = $region3
  $region8: #{patchcore_forward.6} parent=0 // loop_exit
    _

// kernel: squeeze.5
$region0: #{squeeze.5}
  %s0 = inlined_call_operand.vmem [shape: s32[128], index: 0, kind: input, shape index: {}]
  %s1 = inlined_call_operand.vmem [shape: s32[2,64], index: 1, kind: output, shape index: {}]
  $region1: #{squeeze.5} parent=0
    #allocation0 [shape = 'u8[4096]{0}', space=vmem, size = 0x1000, scoped, tag = 'scoped mem for output reshape']
    #allocation1 [shape = 'u8[4096]{0}', space=vmem, size = 0x1000, scoped, tag = 'scoped mem for input reshape']
    %s3 = ssub.s32 2, 1
    %v4 = vld [vmem:[%s0] sm:%s3]
    %5 = vst [vmem:[#allocation1] sm:%s3] %v4
    %v6 = vld [vmem:[#allocation1] sm:$0x1]
    %vm7 = vcmask 523264
    %8 = vst.msk [vmem:[#allocation0] sm:$0x1] %vm7, %v6
    %v9 = vld [vmem:[#allocation1] sm:$0x1]
    %10 = vrot.lane.b32.xlu0 %v9, 64
    %v11 = vpop.permute.xlu0 %10
    %vm12 = vcmask 523264
    %s13 = scalar_lea.vmem [#allocation0], 1
    %14 = vst.msk [vmem:[%s13] sm:$0x1] %vm12, %v11
    %s16 = ssub.s32 4, 1
    %v17 = vld [vmem:[#allocation0] sm:%s16]
    %s19 = ssub.s32 4, 1
    %20 = vst [vmem:[%s1] sm:%s19] %v17

// kernel: patchcore_forward.7
$region0: #{patchcore_forward.7}
  #allocation0 [shape = 'u32[]', space=smem, size = 0x4, offset = 0x4, fixed_abs, tag = 'smem constant byte address 0x4 - core index']
  #allocation1 [shape = 'u32[72,128]{1,0:T(1,128)}', space=vmem, size = 0x9000, scoped, tag = 'internal scratch']
  %s0 = inlined_call_operand.vmem [shape: bf16[128,128], index: 0, kind: input, shape index: {}]
  %s1 = inlined_call_operand.vmem [shape: bf16[256,128], index: 1, kind: input, shape index: {}]
  %s2 = inlined_call_operand.vmem [shape: f32[256,1], index: 2, kind: input, shape index: {}]
  %s3 = inlined_call_operand.vmem [shape: f32[1,128], index: 3, kind: output, shape index: {0}]
  %s4 = inlined_call_operand.vmem [shape: s32[1,128], index: 4, kind: output, shape index: {1}]
  %5 = xla_tuple %s3, %s4
  %s6 = sld [smem:[#allocation0]]
  $region34: #{patchcore_forward.7} parent=0
    _
  %s8 = ssub.s32 1, %s6
  %s9 = scalar_select 0, %s8, %s6
  // Predicated region
  $region2: #{patchcore_forward.7} parent=0 // pred_check
    _
  $region3: #{patchcore_forward.7} parent=0 // pred_check_branch
    %11 = sbr.rel (0) target = $region5
  $region4: #{patchcore_forward.7} parent=0 // pred_region
    _
  $region5: #{patchcore_forward.7} parent=0 // pred_fallthru
    _
  // Predicated region
  $region6: #{patchcore_forward.7} parent=0 // pred_check
    _
  $region7: #{patchcore_forward.7} parent=0 // pred_check_branch
    %13 = sbr.rel (0) target = $region9
  $region8: #{patchcore_forward.7} parent=0 // pred_region
    _
  $region9: #{patchcore_forward.7} parent=0 // pred_fallthru
    _
  // Predicated region
  $region10: #{patchcore_forward.7} parent=0 // pred_check
    _
  $region11: #{patchcore_forward.7} parent=0 // pred_check_branch
    %15 = sbr.rel (0) target = $region13
  $region12: #{patchcore_forward.7} parent=0 // pred_region
    _
  $region13: #{patchcore_forward.7} parent=0 // pred_fallthru
    _
  %p16 = scmp.eq.s32.totalorder 0, 0
  // Predicated region
  $region14: #{patchcore_forward.7} parent=0 // pred_check
    %p17 = pneg %p16
  $region15: #{patchcore_forward.7} parent=0 // pred_check_branch
    %19 = sbr.rel (%p17) target = $region17
  $region16: #{patchcore_forward.7} parent=0 // pred_region
    %20 = vst [vmem:[%s3] sm:$0x1] inf
    %21 = vst [vmem:[%s4] sm:$0x1] 0
  $region17: #{patchcore_forward.7} parent=0 // pred_fallthru
    _
  %v22 = vld [vmem:[%s1] sm:$0xf]
  %v23 = vld [vmem:[%s1 + $0x4] sm:$0xf]
  %v24 = vld [vmem:[%s1 + $0x8] sm:$0xf]
  %v25 = vld [vmem:[%s1 + $0xc] sm:$0xf]
  %v26 = vld [vmem:[%s1 + $0x10] sm:$0xf]
  %v27 = vld [vmem:[%s1 + $0x14] sm:$0xf]
  %v28 = vld [vmem:[%s1 + $0x18] sm:$0xf]
  %v29 = vld [vmem:[%s1 + $0x1c] sm:$0xf]
  %v30 = vld [vmem:[%s1 + $0x20] sm:$0xf]
  %v31 = vld [vmem:[%s1 + $0x24] sm:$0xf]
  %v32 = vld [vmem:[%s1 + $0x28] sm:$0xf]
  %v33 = vld [vmem:[%s1 + $0x2c] sm:$0xf]
  %v34 = vld [vmem:[%s1 + $0x30] sm:$0xf]
  %v35 = vld [vmem:[%s1 + $0x34] sm:$0xf]
  %v36 = vld [vmem:[%s1 + $0x38] sm:$0xf]
  %v37 = vld [vmem:[%s1 + $0x3c] sm:$0xf]
  %v38 = vld [vmem:[%s1 + $0x40] sm:$0xf]
  %v39 = vld [vmem:[%s1 + $0x44] sm:$0xf]
  %v40 = vld [vmem:[%s1 + $0x48] sm:$0xf]
  %v41 = vld [vmem:[%s1 + $0x4c] sm:$0xf]
  %v42 = vld [vmem:[%s1 + $0x50] sm:$0xf]
  %v43 = vld [vmem:[%s1 + $0x54] sm:$0xf]
  %v44 = vld [vmem:[%s1 + $0x58] sm:$0xf]
  %v45 = vld [vmem:[%s1 + $0x5c] sm:$0xf]
  %v46 = vld [vmem:[%s1 + $0x60] sm:$0xf]
  %v47 = vld [vmem:[%s1 + $0x64] sm:$0xf]
  %v48 = vld [vmem:[%s1 + $0x68] sm:$0xf]
  %v49 = vld [vmem:[%s1 + $0x6c] sm:$0xf]
  %v50 = vld [vmem:[%s1 + $0x70] sm:$0xf]
  %v51 = vld [vmem:[%s1 + $0x74] sm:$0xf]
  %v52 = vld [vmem:[%s1 + $0x78] sm:$0xf]
  %v53 = vld [vmem:[%s1 + $0x7c] sm:$0xf]
  %v54 = vld [vmem:[%s0] sm:$0xf]
  %v55 = vld [vmem:[%s0 + $0x4] sm:$0xf]
  %v56 = vld [vmem:[%s0 + $0x8] sm:$0xf]
  %v57 = vld [vmem:[%s0 + $0xc] sm:$0xf]
  %v58 = vld [vmem:[%s0 + $0x10] sm:$0xf]
  %v59 = vld [vmem:[%s0 + $0x14] sm:$0xf]
  %v60 = vld [vmem:[%s0 + $0x18] sm:$0xf]
  %v61 = vld [vmem:[%s0 + $0x1c] sm:$0xf]
  %v62 = vld [vmem:[%s0 + $0x20] sm:$0xf]
  %v63 = vld [vmem:[%s0 + $0x24] sm:$0xf]
  %v64 = vld [vmem:[%s0 + $0x28] sm:$0xf]
  %v65 = vld [vmem:[%s0 + $0x2c] sm:$0xf]
  %v66 = vld [vmem:[%s0 + $0x30] sm:$0xf]
  %v67 = vld [vmem:[%s0 + $0x34] sm:$0xf]
  %v68 = vld [vmem:[%s0 + $0x38] sm:$0xf]
  %v69 = vld [vmem:[%s0 + $0x3c] sm:$0xf]
  %v102 = vunpack.c.l.b16 %v22
  %v103 = vunpack.c.l.b16 %v23
  %v104 = vunpack.c.l.b16 %v24
  %v105 = vunpack.c.l.b16 %v25
  %v106 = vunpack.c.l.b16 %v26
  %v107 = vunpack.c.l.b16 %v27
  %v108 = vunpack.c.l.b16 %v28
  %v109 = vunpack.c.l.b16 %v29
  %v110 = vunpack.c.l.b16 %v30
  %v111 = vunpack.c.l.b16 %v31
  %v112 = vunpack.c.l.b16 %v32
  %v113 = vunpack.c.l.b16 %v33
  %v114 = vunpack.c.l.b16 %v34
  %v115 = vunpack.c.l.b16 %v35
  %v116 = vunpack.c.l.b16 %v36
  %v117 = vunpack.c.l.b16 %v37
  %v118 = vunpack.c.l.b16 %v38
  %v119 = vunpack.c.l.b16 %v39
  %v120 = vunpack.c.l.b16 %v40
  %v121 = vunpack.c.l.b16 %v41
  %v122 = vunpack.c.l.b16 %v42
  %v123 = vunpack.c.l.b16 %v43
  %v124 = vunpack.c.l.b16 %v44
  %v125 = vunpack.c.l.b16 %v45
  %v126 = vunpack.c.l.b16 %v46
  %v127 = vunpack.c.l.b16 %v47
  %v128 = vunpack.c.l.b16 %v48
  %v129 = vunpack.c.l.b16 %v49
  %v130 = vunpack.c.l.b16 %v50
  %v131 = vunpack.c.l.b16 %v51
  %v132 = vunpack.c.l.b16 %v52
  %v133 = vunpack.c.l.b16 %v53
  %v134 = vpack.c.b16 %v103, %v102
  %v135 = vpack.c.b16 %v105, %v104
  %v136 = vpack.c.b16 %v107, %v106
  %v137 = vpack.c.b16 %v109, %v108
  %v138 = vpack.c.b16 %v111, %v110
  %v139 = vpack.c.b16 %v113, %v112
  %v140 = vpack.c.b16 %v115, %v114
  %v141 = vpack.c.b16 %v117, %v116
  %v142 = vpack.c.b16 %v119, %v118
  %v143 = vpack.c.b16 %v121, %v120
  %v144 = vpack.c.b16 %v123, %v122
  %v145 = vpack.c.b16 %v125, %v124
  %v146 = vpack.c.b16 %v127, %v126
  %v147 = vpack.c.b16 %v129, %v128
  %v148 = vpack.c.b16 %v131, %v130
  %v149 = vpack.c.b16 %v133, %v132
  %v182 = vunpack.c.l.b16 %v54
  %v183 = vunpack.c.l.b16 %v55
  %v184 = vunpack.c.l.b16 %v56
  %v185 = vunpack.c.l.b16 %v57
  %v186 = vunpack.c.l.b16 %v58
  %v187 = vunpack.c.l.b16 %v59
  %v188 = vunpack.c.l.b16 %v60
  %v189 = vunpack.c.l.b16 %v61
  %v190 = vunpack.c.l.b16 %v62
  %v191 = vunpack.c.l.b16 %v63
  %v192 = vunpack.c.l.b16 %v64
  %v193 = vunpack.c.l.b16 %v65
  %v194 = vunpack.c.l.b16 %v66
  %v195 = vunpack.c.l.b16 %v67
  %v196 = vunpack.c.l.b16 %v68
  %v197 = vunpack.c.l.b16 %v69
  %v198 = vpack.c.b16 %v183, %v182
  %v199 = vpack.c.b16 %v185, %v184
  %v200 = vpack.c.b16 %v187, %v186
  %v201 = vpack.c.b16 %v189, %v188
  %v202 = vpack.c.b16 %v191, %v190
  %v203 = vpack.c.b16 %v193, %v192
  %v204 = vpack.c.b16 %v195, %v194
  %v205 = vpack.c.b16 %v197, %v196
  %214 = vmatpush.bf16.xpose.msra.mxu0 %v205
  %215 = vmatpush.bf16.xpose.msra.mxu0 %v204
  %216 = vmatpush.bf16.xpose.msra.mxu0 %v203
  %217 = vmatpush.bf16.xpose.msra.mxu0 %v202
  %218 = vmatpush.bf16.xpose.msra.mxu0 %v201
  %219 = vmatpush.bf16.xpose.msra.mxu0 %v200
  %220 = vmatpush.bf16.xpose.msra.mxu0 %v199
  %221 = vmatpush.bf16.xpose.msra.mxu0 %v198
  %222 = vmatmul.bf16.gmra.mxu0 %v134
  %v223 = vpop.f32.mrf.mxu0
  %v224 = vadd.f32 0.0, %v223
  %v225 = vpop.f32.mrf.mxu0
  %v226 = vadd.f32 0.0, %v225
  %227 = vmatmul.bf16.gmra.mxu0 %v135
  %v228 = vpop.f32.mrf.mxu0
  %v229 = vadd.f32 0.0, %v228
  %v230 = vpop.f32.mrf.mxu0
  %v231 = vadd.f32 0.0, %v230
  %232 = vmatmul.bf16.gmra.mxu0 %v136
  %v233 = vpop.f32.mrf.mxu0
  %v234 = vadd.f32 0.0, %v233
  %v235 = vpop.f32.mrf.mxu0
  %v236 = vadd.f32 0.0, %v235
  %237 = vmatmul.bf16.gmra.mxu0 %v137
  %v238 = vpop.f32.mrf.mxu0
  %v239 = vadd.f32 0.0, %v238
  %v240 = vpop.f32.mrf.mxu0
  %v241 = vadd.f32 0.0, %v240
  %242 = vmatmul.bf16.gmra.mxu0 %v138
  %v243 = vpop.f32.mrf.mxu0
  %v244 = vadd.f32 0.0, %v243
  %v245 = vpop.f32.mrf.mxu0
  %v246 = vadd.f32 0.0, %v245
  %247 = vmatmul.bf16.gmra.mxu0 %v139
  %v248 = vpop.f32.mrf.mxu0
  %v249 = vadd.f32 0.0, %v248
  %v250 = vpop.f32.mrf.mxu0
  %v251 = vadd.f32 0.0, %v250
  %252 = vmatmul.bf16.gmra.mxu0 %v140
  %v253 = vpop.f32.mrf.mxu0
  %v254 = vadd.f32 0.0, %v253
  %v255 = vpop.f32.mrf.mxu0
  %v256 = vadd.f32 0.0, %v255
  %257 = vmatmul.bf16.gmra.mxu0 %v141
  %v258 = vpop.f32.mrf.mxu0
  %v259 = vadd.f32 0.0, %v258
  %v260 = vpop.f32.mrf.mxu0
  %v261 = vadd.f32 0.0, %v260
  %262 = vmatmul.bf16.gmra.mxu0 %v142
  %v263 = vpop.f32.mrf.mxu0
  %v264 = vadd.f32 0.0, %v263
  %v265 = vpop.f32.mrf.mxu0
  %v266 = vadd.f32 0.0, %v265
  %267 = vmatmul.bf16.gmra.mxu0 %v143
  %v268 = vpop.f32.mrf.mxu0
  %v269 = vadd.f32 0.0, %v268
  %v270 = vpop.f32.mrf.mxu0
  %v271 = vadd.f32 0.0, %v270
  %272 = vmatmul.bf16.gmra.mxu0 %v144
  %v273 = vpop.f32.mrf.mxu0
  %v274 = vadd.f32 0.0, %v273
  %v275 = vpop.f32.mrf.mxu0
  %v276 = vadd.f32 0.0, %v275
  %277 = vmatmul.bf16.gmra.mxu0 %v145
  %v278 = vpop.f32.mrf.mxu0
  %v279 = vadd.f32 0.0, %v278
  %v280 = vpop.f32.mrf.mxu0
  %v281 = vadd.f32 0.0, %v280
  %282 = vmatmul.bf16.gmra.mxu0 %v146
  %v283 = vpop.f32.mrf.mxu0
  %v284 = vadd.f32 0.0, %v283
  %v285 = vpop.f32.mrf.mxu0
  %v286 = vadd.f32 0.0, %v285
  %287 = vmatmul.bf16.gmra.mxu0 %v147
  %v288 = vpop.f32.mrf.mxu0
  %v289 = vadd.f32 0.0, %v288
  %v290 = vpop.f32.mrf.mxu0
  %v291 = vadd.f32 0.0, %v290
  %292 = vmatmul.bf16.gmra.mxu0 %v148
  %v293 = vpop.f32.mrf.mxu0
  %v294 = vadd.f32 0.0, %v293
  %v295 = vpop.f32.mrf.mxu0
  %v296 = vadd.f32 0.0, %v295
  %297 = vmatmul.bf16.gmra.mxu0 %v149
  %v298 = vpop.f32.mrf.mxu0
  %v299 = vadd.f32 0.0, %v298
  %v300 = vpop.f32.mrf.mxu0
  %v301 = vadd.f32 0.0, %v300
  %302 = vdwg.mxu0
  %v303 = vmul.f32 %v224, -2.0
  %v304 = vmul.f32 %v226, -2.0
  %v305 = vmul.f32 %v229, -2.0
  %v306 = vmul.f32 %v231, -2.0
  %v307 = vmul.f32 %v234, -2.0
  %v308 = vmul.f32 %v236, -2.0
  %v309 = vmul.f32 %v239, -2.0
  %v310 = vmul.f32 %v241, -2.0
  %v311 = vmul.f32 %v244, -2.0
  %v312 = vmul.f32 %v246, -2.0
  %v313 = vmul.f32 %v249, -2.0
  %v314 = vmul.f32 %v251, -2.0
  %v315 = vmul.f32 %v254, -2.0
  %v316 = vmul.f32 %v256, -2.0
  %v317 = vmul.f32 %v259, -2.0
  %v318 = vmul.f32 %v261, -2.0
  %v319 = vmul.f32 %v264, -2.0
  %v320 = vmul.f32 %v266, -2.0
  %v321 = vmul.f32 %v269, -2.0
  %v322 = vmul.f32 %v271, -2.0
  %v323 = vmul.f32 %v274, -2.0
  %v324 = vmul.f32 %v276, -2.0
  %v325 = vmul.f32 %v279, -2.0
  %v326 = vmul.f32 %v281, -2.0
  %v327 = vmul.f32 %v284, -2.0
  %v328 = vmul.f32 %v286, -2.0
  %v329 = vmul.f32 %v289, -2.0
  %v330 = vmul.f32 %v291, -2.0
  %v331 = vmul.f32 %v294, -2.0
  %v332 = vmul.f32 %v296, -2.0
  %v333 = vmul.f32 %v299, -2.0
  %v334 = vmul.f32 %v301, -2.0
  %v335 = vld [vmem:[%s2] sm:$0xff]
  %v336 = vld [vmem:[%s2 + $0x8] sm:$0xff]
  %v337 = vld [vmem:[%s2 + $0x10] sm:$0xff]
  %v338 = vld [vmem:[%s2 + $0x18] sm:$0xff]
  %v339 = vld [vmem:[%s2 + $0x20] sm:$0xff]
  %v340 = vld [vmem:[%s2 + $0x28] sm:$0xff]
  %v341 = vld [vmem:[%s2 + $0x30] sm:$0xff]
  %v342 = vld [vmem:[%s2 + $0x38] sm:$0xff]
  %v343 = vld [vmem:[%s2 + $0x40] sm:$0xff]
  %v344 = vld [vmem:[%s2 + $0x48] sm:$0xff]
  %v345 = vld [vmem:[%s2 + $0x50] sm:$0xff]
  %v346 = vld [vmem:[%s2 + $0x58] sm:$0xff]
  %v347 = vld [vmem:[%s2 + $0x60] sm:$0xff]
  %v348 = vld [vmem:[%s2 + $0x68] sm:$0xff]
  %v349 = vld [vmem:[%s2 + $0x70] sm:$0xff]
  %v350 = vld [vmem:[%s2 + $0x78] sm:$0xff]
  %v351 = vld [vmem:[%s2 + $0x80] sm:$0xff]
  %v352 = vld [vmem:[%s2 + $0x88] sm:$0xff]
  %v353 = vld [vmem:[%s2 + $0x90] sm:$0xff]
  %v354 = vld [vmem:[%s2 + $0x98] sm:$0xff]
  %v355 = vld [vmem:[%s2 + $0xa0] sm:$0xff]
  %v356 = vld [vmem:[%s2 + $0xa8] sm:$0xff]
  %v357 = vld [vmem:[%s2 + $0xb0] sm:$0xff]
  %v358 = vld [vmem:[%s2 + $0xb8] sm:$0xff]
  %v359 = vld [vmem:[%s2 + $0xc0] sm:$0xff]
  %v360 = vld [vmem:[%s2 + $0xc8] sm:$0xff]
  %v361 = vld [vmem:[%s2 + $0xd0] sm:$0xff]
  %v362 = vld [vmem:[%s2 + $0xd8] sm:$0xff]
  %v363 = vld [vmem:[%s2 + $0xe0] sm:$0xff]
  %v364 = vld [vmem:[%s2 + $0xe8] sm:$0xff]
  %v365 = vld [vmem:[%s2 + $0xf0] sm:$0xff]
  %v366 = vld [vmem:[%s2 + $0xf8] sm:$0xff]
  %368 = vset.pattern.permute.xlu0 0
  %369 = vperm.xlu0 %368, %v335
  %v370 = vpop.permute.xlu0 %369
  %373 = vset.pattern.permute.xlu0 0
  %374 = vperm.xlu0 %373, %v336
  %v375 = vpop.permute.xlu0 %374
  %378 = vset.pattern.permute.xlu0 0
  %379 = vperm.xlu0 %378, %v337
  %v380 = vpop.permute.xlu0 %379
  %383 = vset.pattern.permute.xlu0 0
  %384 = vperm.xlu0 %383, %v338
  %v385 = vpop.permute.xlu0 %384
  %388 = vset.pattern.permute.xlu0 0
  %389 = vperm.xlu0 %388, %v339
  %v390 = vpop.permute.xlu0 %389
  %393 = vset.pattern.permute.xlu0 0
  %394 = vperm.xlu0 %393, %v340
  %v395 = vpop.permute.xlu0 %394
  %398 = vset.pattern.permute.xlu0 0
  %399 = vperm.xlu0 %398, %v341
  %v400 = vpop.permute.xlu0 %399
  %403 = vset.pattern.permute.xlu0 0
  %404 = vperm.xlu0 %403, %v342
  %v405 = vpop.permute.xlu0 %404
  %408 = vset.pattern.permute.xlu0 0
  %409 = vperm.xlu0 %408, %v343
  %v410 = vpop.permute.xlu0 %409
  %413 = vset.pattern.permute.xlu0 0
  %414 = vperm.xlu0 %413, %v344
  %v415 = vpop.permute.xlu0 %414
  %418 = vset.pattern.permute.xlu0 0
  %419 = vperm.xlu0 %418, %v345
  %v420 = vpop.permute.xlu0 %419
  %423 = vset.pattern.permute.xlu0 0
  %424 = vperm.xlu0 %423, %v346
  %v425 = vpop.permute.xlu0 %424
  %428 = vset.pattern.permute.xlu0 0
  %429 = vperm.xlu0 %428, %v347
  %v430 = vpop.permute.xlu0 %429
  %433 = vset.pattern.permute.xlu0 0
  %434 = vperm.xlu0 %433, %v348
  %v435 = vpop.permute.xlu0 %434
  %438 = vset.pattern.permute.xlu0 0
  %439 = vperm.xlu0 %438, %v349
  %v440 = vpop.permute.xlu0 %439
  %443 = vset.pattern.permute.xlu0 0
  %444 = vperm.xlu0 %443, %v350
  %v445 = vpop.permute.xlu0 %444
  %448 = vset.pattern.permute.xlu0 0
  %449 = vperm.xlu0 %448, %v351
  %v450 = vpop.permute.xlu0 %449
  %453 = vset.pattern.permute.xlu0 0
  %454 = vperm.xlu0 %453, %v352
  %v455 = vpop.permute.xlu0 %454
  %458 = vset.pattern.permute.xlu0 0
  %459 = vperm.xlu0 %458, %v353
  %v460 = vpop.permute.xlu0 %459
  %463 = vset.pattern.permute.xlu0 0
  %464 = vperm.xlu0 %463, %v354
  %v465 = vpop.permute.xlu0 %464
  %468 = vset.pattern.permute.xlu0 0
  %469 = vperm.xlu0 %468, %v355
  %v470 = vpop.permute.xlu0 %469
  %473 = vset.pattern.permute.xlu0 0
  %474 = vperm.xlu0 %473, %v356
  %v475 = vpop.permute.xlu0 %474
  %478 = vset.pattern.permute.xlu0 0
  %479 = vperm.xlu0 %478, %v357
  %v480 = vpop.permute.xlu0 %479
  %483 = vset.pattern.permute.xlu0 0
  %484 = vperm.xlu0 %483, %v358
  %v485 = vpop.permute.xlu0 %484
  %488 = vset.pattern.permute.xlu0 0
  %489 = vperm.xlu0 %488, %v359
  %v490 = vpop.permute.xlu0 %489
  %493 = vset.pattern.permute.xlu0 0
  %494 = vperm.xlu0 %493, %v360
  %v495 = vpop.permute.xlu0 %494
  %498 = vset.pattern.permute.xlu0 0
  %499 = vperm.xlu0 %498, %v361
  %v500 = vpop.permute.xlu0 %499
  %503 = vset.pattern.permute.xlu0 0
  %504 = vperm.xlu0 %503, %v362
  %v505 = vpop.permute.xlu0 %504
  %508 = vset.pattern.permute.xlu0 0
  %509 = vperm.xlu0 %508, %v363
  %v510 = vpop.permute.xlu0 %509
  %513 = vset.pattern.permute.xlu0 0
  %514 = vperm.xlu0 %513, %v364
  %v515 = vpop.permute.xlu0 %514
  %518 = vset.pattern.permute.xlu0 0
  %519 = vperm.xlu0 %518, %v365
  %v520 = vpop.permute.xlu0 %519
  %523 = vset.pattern.permute.xlu0 0
  %524 = vperm.xlu0 %523, %v366
  %v525 = vpop.permute.xlu0 %524
  %v527 = vadd.f32 %v303, %v370
  %v528 = vadd.f32 %v304, %v375
  %v529 = vadd.f32 %v305, %v380
  %v530 = vadd.f32 %v306, %v385
  %v531 = vadd.f32 %v307, %v390
  %v532 = vadd.f32 %v308, %v395
  %v533 = vadd.f32 %v309, %v400
  %v534 = vadd.f32 %v310, %v405
  %v535 = vadd.f32 %v311, %v410
  %v536 = vadd.f32 %v312, %v415
  %v537 = vadd.f32 %v313, %v420
  %v538 = vadd.f32 %v314, %v425
  %v539 = vadd.f32 %v315, %v430
  %v540 = vadd.f32 %v316, %v435
  %v541 = vadd.f32 %v317, %v440
  %v542 = vadd.f32 %v318, %v445
  %v543 = vadd.f32 %v319, %v450
  %v544 = vadd.f32 %v320, %v455
  %v545 = vadd.f32 %v321, %v460
  %v546 = vadd.f32 %v322, %v465
  %v547 = vadd.f32 %v323, %v470
  %v548 = vadd.f32 %v324, %v475
  %v549 = vadd.f32 %v325, %v480
  %v550 = vadd.f32 %v326, %v485
  %v551 = vadd.f32 %v327, %v490
  %v552 = vadd.f32 %v328, %v495
  %v553 = vadd.f32 %v329, %v500
  %v554 = vadd.f32 %v330, %v505
  %v555 = vadd.f32 %v331, %v510
  %v556 = vadd.f32 %v332, %v515
  %v557 = vadd.f32 %v333, %v520
  %v558 = vadd.f32 %v334, %v525
  %v559 = vmin.f32 %v527, %v531
  %v560 = vmin.f32 %v528, %v532
  %v561 = vmin.f32 %v529, %v533
  %v562 = vmin.f32 %v530, %v534
  %v563 = vmin.f32 %v559, %v535
  %v564 = vmin.f32 %v560, %v536
  %v565 = vmin.f32 %v561, %v537
  %v566 = vmin.f32 %v562, %v538
  %v567 = vmin.f32 %v563, %v539
  %v568 = vmin.f32 %v564, %v540
  %v569 = vmin.f32 %v565, %v541
  %v570 = vmin.f32 %v566, %v542
  %v571 = vmin.f32 %v567, %v543
  %v572 = vmin.f32 %v568, %v544
  %v573 = vmin.f32 %v569, %v545
  %v574 = vmin.f32 %v570, %v546
  %v575 = vmin.f32 %v571, %v547
  %v576 = vmin.f32 %v572, %v548
  %v577 = vmin.f32 %v573, %v549
  %v578 = vmin.f32 %v574, %v550
  %v579 = vmin.f32 %v575, %v551
  %v580 = vmin.f32 %v576, %v552
  %v581 = vmin.f32 %v577, %v553
  %v582 = vmin.f32 %v578, %v554
  %v583 = vmin.f32 %v579, %v555
  %v584 = vmin.f32 %v580, %v556
  %v585 = vmin.f32 %v581, %v557
  %v586 = vmin.f32 %v582, %v558
  %v587 = vmin.f32 %v583, %v584
  %v588 = vmin.f32 %v585, %v586
  %v589 = vmin.f32 %v587, %v588
  %v590 = vrot.slane %v589, 4
  %v591 = vmin.f32 %v589, %v590
  %v592 = vrot.slane %v591, 2
  %v593 = vmin.f32 %v591, %v592
  %v594 = vrot.slane %v593, 1
  %v595 = vmin.f32 %v593, %v594
  %v596 = vlaneseq
  %v597 = vshrl.u32 %v596, 7
  %v598 = vadd.s32 %v597, 8
  %v599 = vadd.s32 %v597, 16
  %v600 = vadd.s32 %v597, 24
  %v601 = vadd.s32 %v597, 32
  %v602 = vadd.s32 %v597, 40
  %v603 = vadd.s32 %v597, 48
  %v604 = vadd.s32 %v597, 56
  %v605 = vadd.s32 %v597, 64
  %v606 = vadd.s32 %v597, 72
  %v607 = vadd.s32 %v597, 80
  %v608 = vadd.s32 %v597, 88
  %v609 = vadd.s32 %v597, 96
  %v610 = vadd.s32 %v597, 104
  %v611 = vadd.s32 %v597, 112
  %v612 = vadd.s32 %v597, 120
  %v613 = vadd.s32 %v597, 128
  %v614 = vadd.s32 %v597, 136
  %v615 = vadd.s32 %v597, 144
  %v616 = vadd.s32 %v597, 152
  %v617 = vadd.s32 %v597, 160
  %v618 = vadd.s32 %v597, 168
  %v619 = vadd.s32 %v597, 176
  %v620 = vadd.s32 %v597, 184
  %v621 = vadd.s32 %v597, 192
  %v622 = vadd.s32 %v597, 200
  %v623 = vadd.s32 %v597, 208
  %v624 = vadd.s32 %v597, 216
  %v625 = vadd.s32 %v597, 224
  %v626 = vadd.s32 %v597, 232
  %v627 = vadd.s32 %v597, 240
  %v628 = vadd.s32 %v597, 248
  %vm629 = vcmp.eq.f32.partialorder %v527, %v595
  %vm630 = vcmp.eq.f32.partialorder %v528, %v595
  %vm631 = vcmp.eq.f32.partialorder %v529, %v595
  %vm632 = vcmp.eq.f32.partialorder %v530, %v595
  %vm633 = vcmp.eq.f32.partialorder %v531, %v595
  %vm634 = vcmp.eq.f32.partialorder %v532, %v595
  %vm635 = vcmp.eq.f32.partialorder %v533, %v595
  %vm636 = vcmp.eq.f32.partialorder %v534, %v595
  %vm637 = vcmp.eq.f32.partialorder %v535, %v595
  %vm638 = vcmp.eq.f32.partialorder %v536, %v595
  %vm639 = vcmp.eq.f32.partialorder %v537, %v595
  %vm640 = vcmp.eq.f32.partialorder %v538, %v595
  %vm641 = vcmp.eq.f32.partialorder %v539, %v595
  %vm642 = vcmp.eq.f32.partialorder %v540, %v595
  %vm643 = vcmp.eq.f32.partialorder %v541, %v595
  %vm644 = vcmp.eq.f32.partialorder %v542, %v595
  %vm645 = vcmp.eq.f32.partialorder %v543, %v595
  %vm646 = vcmp.eq.f32.partialorder %v544, %v595
  %vm647 = vcmp.eq.f32.partialorder %v545, %v595
  %vm648 = vcmp.eq.f32.partialorder %v546, %v595
  %vm649 = vcmp.eq.f32.partialorder %v547, %v595
  %vm650 = vcmp.eq.f32.partialorder %v548, %v595
  %vm651 = vcmp.eq.f32.partialorder %v549, %v595
  %vm652 = vcmp.eq.f32.partialorder %v550, %v595
  %vm653 = vcmp.eq.f32.partialorder %v551, %v595
  %vm654 = vcmp.eq.f32.partialorder %v552, %v595
  %vm655 = vcmp.eq.f32.partialorder %v553, %v595
  %vm656 = vcmp.eq.f32.partialorder %v554, %v595
  %vm657 = vcmp.eq.f32.partialorder %v555, %v595
  %vm658 = vcmp.eq.f32.partialorder %v556, %v595
  %vm659 = vcmp.eq.f32.partialorder %v557, %v595
  %vm660 = vcmp.eq.f32.partialorder %v558, %v595
  %v661 = vsel %vm629, %v597, 1073741824
  %v662 = vsel %vm630, %v598, 1073741824
  %v663 = vsel %vm631, %v599, 1073741824
  %v664 = vsel %vm632, %v600, 1073741824
  %v665 = vsel %vm633, %v601, 1073741824
  %v666 = vsel %vm634, %v602, 1073741824
  %v667 = vsel %vm635, %v603, 1073741824
  %v668 = vsel %vm636, %v604, 1073741824
  %v669 = vsel %vm637, %v605, 1073741824
  %v670 = vsel %vm638, %v606, 1073741824
  %v671 = vsel %vm639, %v607, 1073741824
  %v672 = vsel %vm640, %v608, 1073741824
  %v673 = vsel %vm641, %v609, 1073741824
  %v674 = vsel %vm642, %v610, 1073741824
  %v675 = vsel %vm643, %v611, 1073741824
  %v676 = vsel %vm644, %v612, 1073741824
  %v677 = vsel %vm645, %v613, 1073741824
  %v678 = vsel %vm646, %v614, 1073741824
  %v679 = vsel %vm647, %v615, 1073741824
  %v680 = vsel %vm648, %v616, 1073741824
  %v681 = vsel %vm649, %v617, 1073741824
  %v682 = vsel %vm650, %v618, 1073741824
  %v683 = vsel %vm651, %v619, 1073741824
  %v684 = vsel %vm652, %v620, 1073741824
  %v685 = vsel %vm653, %v621, 1073741824
  %v686 = vsel %vm654, %v622, 1073741824
  %v687 = vsel %vm655, %v623, 1073741824
  %v688 = vsel %vm656, %v624, 1073741824
  %v689 = vsel %vm657, %v625, 1073741824
  %v690 = vsel %vm658, %v626, 1073741824
  %v691 = vsel %vm659, %v627, 1073741824
  %v692 = vsel %vm660, %v628, 1073741824
  %vm693 = vcmp.lt.s32.totalorder %v661, %v665
  %v694 = vsel %vm693, %v661, %v665
  %vm695 = vcmp.lt.s32.totalorder %v662, %v666
  %v696 = vsel %vm695, %v662, %v666
  %vm697 = vcmp.lt.s32.totalorder %v663, %v667
  %v698 = vsel %vm697, %v663, %v667
  %vm699 = vcmp.lt.s32.totalorder %v664, %v668
  %v700 = vsel %vm699, %v664, %v668
  %vm701 = vcmp.lt.s32.totalorder %v694, %v669
  %v702 = vsel %vm701, %v694, %v669
  %vm703 = vcmp.lt.s32.totalorder %v696, %v670
  %v704 = vsel %vm703, %v696, %v670
  %vm705 = vcmp.lt.s32.totalorder %v698, %v671
  %v706 = vsel %vm705, %v698, %v671
  %vm707 = vcmp.lt.s32.totalorder %v700, %v672
  %v708 = vsel %vm707, %v700, %v672
  %vm709 = vcmp.lt.s32.totalorder %v702, %v673
  %v710 = vsel %vm709, %v702, %v673
  %vm711 = vcmp.lt.s32.totalorder %v704, %v674
  %v712 = vsel %vm711, %v704, %v674
  %vm713 = vcmp.lt.s32.totalorder %v706, %v675
  %v714 = vsel %vm713, %v706, %v675
  %vm715 = vcmp.lt.s32.totalorder %v708, %v676
  %v716 = vsel %vm715, %v708, %v676
  %vm717 = vcmp.lt.s32.totalorder %v710, %v677
  %v718 = vsel %vm717, %v710, %v677
  %vm719 = vcmp.lt.s32.totalorder %v712, %v678
  %v720 = vsel %vm719, %v712, %v678
  %vm721 = vcmp.lt.s32.totalorder %v714, %v679
  %v722 = vsel %vm721, %v714, %v679
  %vm723 = vcmp.lt.s32.totalorder %v716, %v680
  %v724 = vsel %vm723, %v716, %v680
  %vm725 = vcmp.lt.s32.totalorder %v718, %v681
  %v726 = vsel %vm725, %v718, %v681
  %vm727 = vcmp.lt.s32.totalorder %v720, %v682
  %v728 = vsel %vm727, %v720, %v682
  %vm729 = vcmp.lt.s32.totalorder %v722, %v683
  %v730 = vsel %vm729, %v722, %v683
  %vm731 = vcmp.lt.s32.totalorder %v724, %v684
  %v732 = vsel %vm731, %v724, %v684
  %vm733 = vcmp.lt.s32.totalorder %v726, %v685
  %v734 = vsel %vm733, %v726, %v685
  %vm735 = vcmp.lt.s32.totalorder %v728, %v686
  %v736 = vsel %vm735, %v728, %v686
  %vm737 = vcmp.lt.s32.totalorder %v730, %v687
  %v738 = vsel %vm737, %v730, %v687
  %vm739 = vcmp.lt.s32.totalorder %v732, %v688
  %v740 = vsel %vm739, %v732, %v688
  %vm741 = vcmp.lt.s32.totalorder %v734, %v689
  %v742 = vsel %vm741, %v734, %v689
  %vm743 = vcmp.lt.s32.totalorder %v736, %v690
  %v744 = vsel %vm743, %v736, %v690
  %vm745 = vcmp.lt.s32.totalorder %v738, %v691
  %v746 = vsel %vm745, %v738, %v691
  %vm747 = vcmp.lt.s32.totalorder %v740, %v692
  %v748 = vsel %vm747, %v740, %v692
  %vm749 = vcmp.lt.s32.totalorder %v742, %v744
  %v750 = vsel %vm749, %v742, %v744
  %vm751 = vcmp.lt.s32.totalorder %v746, %v748
  %v752 = vsel %vm751, %v746, %v748
  %vm753 = vcmp.lt.s32.totalorder %v750, %v752
  %v754 = vsel %vm753, %v750, %v752
  %v755 = vrot.slane %v754, 4
  %vm756 = vcmp.lt.s32.totalorder %v754, %v755
  %v757 = vsel %vm756, %v754, %v755
  %v758 = vrot.slane %v757, 2
  %vm759 = vcmp.lt.s32.totalorder %v757, %v758
  %v760 = vsel %vm759, %v757, %v758
  %v761 = vrot.slane %v760, 1
  %vm762 = vcmp.lt.s32.totalorder %v760, %v761
  %v763 = vsel %vm762, %v760, %v761
  %s764 = smul.u32 0, 256
  %v765 = vstv %s764
  %v766 = vadd.s32 %v763, %v765
  %v767 = vld [vmem:[%s3] sm:$0x1]
  %vm768 = vcmp.lt.f32.partialorder %v595, %v767
  %v769 = vld [vmem:[%s4] sm:$0x1]
  %v770 = vsel %vm768, %v766, %v769
  %771 = vst [vmem:[%s4] sm:$0x1] %v770
  %v772 = vld [vmem:[%s3] sm:$0x1]
  %v773 = vsel %vm768, %v595, %v772
  %774 = vst [vmem:[%s3] sm:$0x1] %v773
  // Predicated region
  $region18: #{patchcore_forward.7} parent=0 // pred_check
    _
  $region19: #{patchcore_forward.7} parent=0 // pred_check_branch
    %776 = sbr.rel (0) target = $region21
  $region20: #{patchcore_forward.7} parent=0 // pred_region
    _
  $region21: #{patchcore_forward.7} parent=0 // pred_fallthru
    _
  // Predicated region
  $region22: #{patchcore_forward.7} parent=0 // pred_check
    _
  $region23: #{patchcore_forward.7} parent=0 // pred_check_branch
    %778 = sbr.rel (0) target = $region25
  $region24: #{patchcore_forward.7} parent=0 // pred_region
    _
  $region25: #{patchcore_forward.7} parent=0 // pred_fallthru
    _
  // Predicated region
  $region26: #{patchcore_forward.7} parent=0 // pred_check
    _
  $region27: #{patchcore_forward.7} parent=0 // pred_check_branch
    %780 = sbr.rel (0) target = $region29
  $region28: #{patchcore_forward.7} parent=0 // pred_region
    _
  $region29: #{patchcore_forward.7} parent=0 // pred_fallthru
    _
  // Predicated region
  $region30: #{patchcore_forward.7} parent=0 // pred_check
    _
  $region31: #{patchcore_forward.7} parent=0 // pred_check_branch
    %782 = sbr.rel (0) target = $region33
  $region32: #{patchcore_forward.7} parent=0 // pred_region
    _
  $region33: #{patchcore_forward.7} parent=0 // pred_fallthru
    _

// kernel: neg.3
$region0: #{neg.3}
  #allocation0 [shape = 's32[1]{0}', space=sflag, size = 0x4, scoped, tag = 'scoped memory for neg.3']
  %s0 = inlined_call_operand.vmem [shape: f32[2,256], index: 0, kind: input, shape index: {}]
  %s1 = inlined_call_operand.vmem [shape: f32[2,256], index: 1, kind: output, shape index: {}]
  %v2 = vld [vmem:[%s0] sm:$0x3]
  %3 = xla_tuple %v2
  %4 = xla_tuple %3
  %v5 = vxor.u32 %v2, 2147483648
  %6 = xla_tuple %v5
  %7 = vst [vmem:[%s1] sm:$0x3] %v5
  %s8 = scalar_lea.vmem %s0, 2
  %v9 = vld [vmem:[%s8] sm:$0x3]
  %10 = xla_tuple %v9
  %11 = xla_tuple %10
  %v12 = vxor.u32 %v9, 2147483648
  %13 = xla_tuple %v12
  %s14 = scalar_lea.vmem %s1, 2
  %15 = vst [vmem:[%s14] sm:$0x3] %v12

// kernel: patchcore_forward.8
$region0: #{patchcore_forward.8}
  #allocation0 [shape = 'u32[]', space=smem, size = 0x4, offset = 0x4, fixed_abs, tag = 'smem constant byte address 0x4 - core index']
  #allocation1 [shape = 'u32[72,128]{1,0:T(1,128)}', space=vmem, size = 0x9000, scoped, tag = 'internal scratch']
  %s0 = inlined_call_operand.vmem [shape: bf16[2,128], index: 0, kind: input, shape index: {}]
  %s1 = inlined_call_operand.vmem [shape: f32[2,1], index: 1, kind: input, shape index: {}]
  %s2 = inlined_call_operand.vmem [shape: bf16[256,128], index: 2, kind: input, shape index: {}]
  %s3 = inlined_call_operand.vmem [shape: f32[1,256], index: 3, kind: input, shape index: {}]
  %s4 = inlined_call_operand.vmem [shape: f32[2,256], index: 4, kind: output, shape index: {}]
  %s5 = sld [smem:[#allocation0]]
  $region26: #{patchcore_forward.8} parent=0
    _
  %s7 = ssub.s32 1, %s5
  %s8 = scalar_select 0, %s7, %s5
  // Predicated region
  $region2: #{patchcore_forward.8} parent=0 // pred_check
    _
  $region3: #{patchcore_forward.8} parent=0 // pred_check_branch
    %10 = sbr.rel (0) target = $region5
  $region4: #{patchcore_forward.8} parent=0 // pred_region
    _
  $region5: #{patchcore_forward.8} parent=0 // pred_fallthru
    _
  // Predicated region
  $region6: #{patchcore_forward.8} parent=0 // pred_check
    _
  $region7: #{patchcore_forward.8} parent=0 // pred_check_branch
    %12 = sbr.rel (0) target = $region9
  $region8: #{patchcore_forward.8} parent=0 // pred_region
    _
  $region9: #{patchcore_forward.8} parent=0 // pred_fallthru
    _
  // Predicated region
  $region10: #{patchcore_forward.8} parent=0 // pred_check
    _
  $region11: #{patchcore_forward.8} parent=0 // pred_check_branch
    %14 = sbr.rel (0) target = $region13
  $region12: #{patchcore_forward.8} parent=0 // pred_region
    _
  $region13: #{patchcore_forward.8} parent=0 // pred_fallthru
    _
  // Predicated region
  $region14: #{patchcore_forward.8} parent=0 // pred_check
    _
  $region15: #{patchcore_forward.8} parent=0 // pred_check_branch
    %16 = sbr.rel (0) target = $region17
  $region16: #{patchcore_forward.8} parent=0 // pred_region
    _
  $region17: #{patchcore_forward.8} parent=0 // pred_fallthru
    _
  %v17 = vld [vmem:[%s1] sm:$0x3]
  %v18 = vld [vmem:[%s0] sm:$0x1]
  %v19 = vld [vmem:[%s2] sm:$0xf]
  %v20 = vld [vmem:[%s2 + $0x4] sm:$0xf]
  %v21 = vld [vmem:[%s2 + $0x8] sm:$0xf]
  %v22 = vld [vmem:[%s2 + $0xc] sm:$0xf]
  %v23 = vld [vmem:[%s2 + $0x10] sm:$0xf]
  %v24 = vld [vmem:[%s2 + $0x14] sm:$0xf]
  %v25 = vld [vmem:[%s2 + $0x18] sm:$0xf]
  %v26 = vld [vmem:[%s2 + $0x1c] sm:$0xf]
  %v27 = vld [vmem:[%s2 + $0x20] sm:$0xf]
  %v28 = vld [vmem:[%s2 + $0x24] sm:$0xf]
  %v29 = vld [vmem:[%s2 + $0x28] sm:$0xf]
  %v30 = vld [vmem:[%s2 + $0x2c] sm:$0xf]
  %v31 = vld [vmem:[%s2 + $0x30] sm:$0xf]
  %v32 = vld [vmem:[%s2 + $0x34] sm:$0xf]
  %v33 = vld [vmem:[%s2 + $0x38] sm:$0xf]
  %v34 = vld [vmem:[%s2 + $0x3c] sm:$0xf]
  %v35 = vld [vmem:[%s2 + $0x40] sm:$0xf]
  %v36 = vld [vmem:[%s2 + $0x44] sm:$0xf]
  %v37 = vld [vmem:[%s2 + $0x48] sm:$0xf]
  %v38 = vld [vmem:[%s2 + $0x4c] sm:$0xf]
  %v39 = vld [vmem:[%s2 + $0x50] sm:$0xf]
  %v40 = vld [vmem:[%s2 + $0x54] sm:$0xf]
  %v41 = vld [vmem:[%s2 + $0x58] sm:$0xf]
  %v42 = vld [vmem:[%s2 + $0x5c] sm:$0xf]
  %v43 = vld [vmem:[%s2 + $0x60] sm:$0xf]
  %v44 = vld [vmem:[%s2 + $0x64] sm:$0xf]
  %v45 = vld [vmem:[%s2 + $0x68] sm:$0xf]
  %v46 = vld [vmem:[%s2 + $0x6c] sm:$0xf]
  %v47 = vld [vmem:[%s2 + $0x70] sm:$0xf]
  %v48 = vld [vmem:[%s2 + $0x74] sm:$0xf]
  %v49 = vld [vmem:[%s2 + $0x78] sm:$0xf]
  %v50 = vld [vmem:[%s2 + $0x7c] sm:$0xf]
  %v83 = vunpack.c.l.b16 %v19
  %v84 = vunpack.c.l.b16 %v20
  %v85 = vunpack.c.l.b16 %v21
  %v86 = vunpack.c.l.b16 %v22
  %v87 = vunpack.c.l.b16 %v23
  %v88 = vunpack.c.l.b16 %v24
  %v89 = vunpack.c.l.b16 %v25
  %v90 = vunpack.c.l.b16 %v26
  %v91 = vunpack.c.l.b16 %v27
  %v92 = vunpack.c.l.b16 %v28
  %v93 = vunpack.c.l.b16 %v29
  %v94 = vunpack.c.l.b16 %v30
  %v95 = vunpack.c.l.b16 %v31
  %v96 = vunpack.c.l.b16 %v32
  %v97 = vunpack.c.l.b16 %v33
  %v98 = vunpack.c.l.b16 %v34
  %v99 = vunpack.c.l.b16 %v35
  %v100 = vunpack.c.l.b16 %v36
  %v101 = vunpack.c.l.b16 %v37
  %v102 = vunpack.c.l.b16 %v38
  %v103 = vunpack.c.l.b16 %v39
  %v104 = vunpack.c.l.b16 %v40
  %v105 = vunpack.c.l.b16 %v41
  %v106 = vunpack.c.l.b16 %v42
  %v107 = vunpack.c.l.b16 %v43
  %v108 = vunpack.c.l.b16 %v44
  %v109 = vunpack.c.l.b16 %v45
  %v110 = vunpack.c.l.b16 %v46
  %v111 = vunpack.c.l.b16 %v47
  %v112 = vunpack.c.l.b16 %v48
  %v113 = vunpack.c.l.b16 %v49
  %v114 = vunpack.c.l.b16 %v50
  %v115 = vpack.c.b16 %v84, %v83
  %v116 = vpack.c.b16 %v86, %v85
  %v117 = vpack.c.b16 %v88, %v87
  %v118 = vpack.c.b16 %v90, %v89
  %v119 = vpack.c.b16 %v92, %v91
  %v120 = vpack.c.b16 %v94, %v93
  %v121 = vpack.c.b16 %v96, %v95
  %v122 = vpack.c.b16 %v98, %v97
  %v123 = vpack.c.b16 %v100, %v99
  %v124 = vpack.c.b16 %v102, %v101
  %v125 = vpack.c.b16 %v104, %v103
  %v126 = vpack.c.b16 %v106, %v105
  %v127 = vpack.c.b16 %v108, %v107
  %v128 = vpack.c.b16 %v110, %v109
  %v129 = vpack.c.b16 %v112, %v111
  %v130 = vpack.c.b16 %v114, %v113
  %147 = vmatpush.bf16.xpose.msra.mxu0 %v122
  %148 = vmatpush.bf16.xpose.msra.mxu0 %v121
  %149 = vmatpush.bf16.xpose.msra.mxu0 %v120
  %150 = vmatpush.bf16.xpose.msra.mxu0 %v119
  %151 = vmatpush.bf16.xpose.msra.mxu0 %v118
  %152 = vmatpush.bf16.xpose.msra.mxu0 %v117
  %153 = vmatpush.bf16.xpose.msra.mxu0 %v116
  %154 = vmatpush.bf16.xpose.msra.mxu0 %v115
  %155 = vmatmul.bf16.gmra.mxu0 %v18
  %v156 = vpop.f32.mrf.mxu0
  %v157 = vadd.f32 0.0, %v156
  %v158 = vpop.f32.mrf.mxu0
  %159 = vdwg.mxu0
  %160 = vmatpush.bf16.xpose.msra.mxu0 %v130
  %161 = vmatpush.bf16.xpose.msra.mxu0 %v129
  %162 = vmatpush.bf16.xpose.msra.mxu0 %v128
  %163 = vmatpush.bf16.xpose.msra.mxu0 %v127
  %164 = vmatpush.bf16.xpose.msra.mxu0 %v126
  %165 = vmatpush.bf16.xpose.msra.mxu0 %v125
  %166 = vmatpush.bf16.xpose.msra.mxu0 %v124
  %167 = vmatpush.bf16.xpose.msra.mxu0 %v123
  %168 = vmatmul.bf16.gmra.mxu0 %v18
  %v169 = vpop.f32.mrf.mxu0
  %v170 = vadd.f32 0.0, %v169
  %v171 = vpop.f32.mrf.mxu0
  %172 = vdwg.mxu0
  %v173 = vmul.f32 %v157, 2.0
  %v174 = vmul.f32 %v170, 2.0
  %176 = vset.pattern.permute.xlu0 0
  %177 = vperm.xlu0 %176, %v17
  %v178 = vpop.permute.xlu0 %177
  %v180 = vsub.f32 %v178, %v173
  %v181 = vsub.f32 %v178, %v174
  %v182 = vld [vmem:[%s3] sm:$0x3]
  %v184 = vperm.slane %v182, 0
  %v185 = vperm.slane %v182, 1
  %v188 = vadd.f32 %v180, %v184
  %v189 = vadd.f32 %v181, %v185
  %v190 = vmax.f32 %v188, 0.0
  %v191 = vmax.f32 %v189, 0.0
  %v194 = vrot.slane %v191, 6
  %vm195 = vcmask 1041408
  %v196 = vsel %vm195, %v190, %v194
  %198 = vst [vmem:[%s4] sm:$0xf] %v196
  // Predicated region
  $region18: #{patchcore_forward.8} parent=0 // pred_check
    _
  $region19: #{patchcore_forward.8} parent=0 // pred_check_branch
    %200 = sbr.rel (0) target = $region21
  $region20: #{patchcore_forward.8} parent=0 // pred_region
    _
  $region21: #{patchcore_forward.8} parent=0 // pred_fallthru
    _
  // Predicated region
  $region22: #{patchcore_forward.8} parent=0 // pred_check
    _
  $region23: #{patchcore_forward.8} parent=0 // pred_check_branch
    %202 = sbr.rel (0) target = $region25
  $region24: #{patchcore_forward.8} parent=0 // pred_region
    _
  $region25: #{patchcore_forward.8} parent=0 // pred_fallthru
    _

// kernel: mul.15
$region0: #{mul.15}
  #allocation2 [shape = 's32[1]{0}', space=sflag, size = 0x4, scoped, tag = 'scoped memory for mul.15']
  %s0 = inlined_call_operand.vmem [shape: f32[2], index: 0, kind: input, shape index: {}]
  %s1 = inlined_call_operand.vmem [shape: f32[2], index: 1, kind: input, shape index: {}]
  %s2 = inlined_call_operand.hbm [shape: f32[2], index: 2, kind: output, shape index: {}]
  $region1: #{mul.15} parent=0
    #allocation0 [shape = 'u8[512]{0}', space=vmem, size = 0x400, scoped, tag = 'operand span for operand 2']
    #allocation1 [shape = 's32[1]{0}', space=sflag, size = 0x4, scoped, tag = 'scoped memory for mul.15']
    %3 = vsyncpa [#allocation1], 0
    %v4 = vld [vmem:[%s0] sm:$0x1]
    %v5 = vld [vmem:[%s1] sm:$0x1]
    %6 = xla_tuple %v4, %v5
    %7 = xla_tuple %6
    %v8 = vmul.f32 %v4, %v5
    %9 = xla_tuple %v8
    %10 = vst [vmem:[#allocation0] sm:$0x1] %v8
    %12 = vsyncadd [#allocation1], 0
    %s14 = sshll.u32 [#allocation0], 4
    %s15 = int_to_ptr.vmem [resolvable:$true] %s14
    %s16 = sshll.u32 %s2, 4
    %s17 = int_to_ptr.hbm [resolvable:$true] %s16
    %19 = dma.vmem_to_hbm [thread:$0]  %s15, 16, %s17, [#allocation1]
    %21 = dma.done [#allocation1], 16
    %22 = vsyncpa [#allocation1], 1

// kernel: patchcore_forward.9
$region0: #{patchcore_forward.9}
  #allocation0 [shape = 'u32[]', space=smem, size = 0x4, offset = 0x4, fixed_abs, tag = 'smem constant byte address 0x4 - core index']
  #allocation1 [shape = 'u32[72,128]{1,0:T(1,128)}', space=vmem, size = 0x9000, scoped, tag = 'internal scratch']
  %s0 = inlined_call_operand.vmem [shape: f32[2,8,8], index: 0, kind: input, shape index: {}]
  %s1 = inlined_call_operand.vmem [shape: f32[32,8], index: 1, kind: input, shape index: {}]
  %s2 = inlined_call_operand.vmem [shape: f32[8,128], index: 2, kind: input, shape index: {}]
  %s3 = inlined_call_operand.hbm [shape: f32[2,32,128], index: 3, kind: output, shape index: {}]
  %s4 = sld [smem:[#allocation0]]
  $region45: #{patchcore_forward.9} parent=0
    _
  %s6 = ssub.s32 1, %s4
  %s7 = scalar_select 0, %s6, %s4
  $region1: #{patchcore_forward.9} parent=0
    #allocation2 [shape = 'u8[32768]{0}', space=vmem, size = 0x8000, scoped, tag = 'output window, operand 0']
    #allocation3 [shape = 's32[2]{0}', space=sflag, size = 0x8, scoped, tag = 'scoped memory for patchcore_forward.9']
    %8 = vsyncpa [#allocation3], 0
    %s9 = scalar_lea.sflag [#allocation3], 1
    %10 = vsyncpa %s9, 0
    loop: start=0, step=1, limit=4
    $region2: #{patchcore_forward.9} parent=1 // loop_pre_header
      _
    $region3: #{patchcore_forward.9} parent=1 // loop_header
      %s12 = sphi 0, %s16
      %p13 = scmp.ge.s32.totalorder %s12, 4
      %s22 = sphi 0, %s24
      %s25 = sphi 0, %s22
      %s26 = sphi 0, %s25
      %s42 = sphi 0, %s26
      %s46 = sphi 0, %s46
      %s48 = sphi 0, %s46
      %s49 = sphi 0, %s48
      %s63 = sphi 0, %s49
      %s67 = sphi 0, %s67
      %s69 = sphi 0, %s67
      %s70 = sphi 0, %s69
      %s84 = sphi 0, %s70
      %s90 = sphi 0, %s92
      %s93 = sphi 0, %s90
      %s94 = sphi 0, %s93
      %s110 = sphi 0, %s94
    $region4: #{patchcore_forward.9} parent=1 // loop_header_branch
      %15 = sbr.rel (%p13) target = $region8
    $region5: #{patchcore_forward.9} parent=1 // loop_body
      %s17 = ssub.s32 %s12, 1
      %s18 = ssub.s32 %s12, 2
      %s19 = sadd.s32 %s12, 1
      %s20 = ssub.s32 %s12, %s19
      %p21 = scmp.eq.s32.totalorder %s20, 0
      %s23 = sadd.s32 %s22, 1
      %s24 = scalar_select %p21, %s22, %s23
      %p27 = pneg %p21
      %p28 = scmp.eq.s32.totalorder %s12, 1
      %p29 = por %p27, %p28
      %p30 = scmp.ne.s32.totalorder %s22, %s25
      %p31 = scmp.eq.s32.totalorder %s12, 0
      %p32 = por %p30, %p31
      %p33 = scmp.ne.s32.totalorder %s22, %s25
      %p34 = scmp.eq.s32.totalorder %s17, 1
      %p35 = por %p33, %p34
      %p36 = scmp.ne.s32.totalorder %s25, %s26
      %p37 = scmp.eq.s32.totalorder %s17, 0
      %p38 = por %p36, %p37
      %p39 = scmp.ne.s32.totalorder %s25, %s26
      %p40 = scmp.eq.s32.totalorder %s18, 1
      %p41 = por %p39, %p40
      %p43 = scmp.ne.s32.totalorder %s26, %s42
      %p44 = scmp.eq.s32.totalorder %s18, 0
      %p45 = por %p43, %p44
      %s47 = sadd.s32 %s46, 1
      %p50 = scmp.eq.s32.totalorder %s12, 1
      %p51 = scmp.ne.s32.totalorder %s46, %s48
      %p52 = scmp.eq.s32.totalorder %s12, 0
      %p53 = por %p51, %p52
      %p54 = scmp.ne.s32.totalorder %s46, %s48
      %p55 = scmp.eq.s32.totalorder %s17, 1
      %p56 = por %p54, %p55
      %p57 = scmp.ne.s32.totalorder %s48, %s49
      %p58 = scmp.eq.s32.totalorder %s17, 0
      %p59 = por %p57, %p58
      %p60 = scmp.ne.s32.totalorder %s48, %s49
      %p61 = scmp.eq.s32.totalorder %s18, 1
      %p62 = por %p60, %p61
      %p64 = scmp.ne.s32.totalorder %s49, %s63
      %p65 = scmp.eq.s32.totalorder %s18, 0
      %p66 = por %p64, %p65
      %s68 = sadd.s32 %s67, 1
      %p71 = scmp.eq.s32.totalorder %s12, 1
      %p72 = scmp.ne.s32.totalorder %s67, %s69
      %p73 = scmp.eq.s32.totalorder %s12, 0
      %p74 = por %p72, %p73
      %p75 = scmp.ne.s32.totalorder %s67, %s69
      %p76 = scmp.eq.s32.totalorder %s17, 1
      %p77 = por %p75, %p76
      %p78 = scmp.ne.s32.totalorder %s69, %s70
      %p79 = scmp.eq.s32.totalorder %s17, 0
      %p80 = por %p78, %p79
      %p81 = scmp.ne.s32.totalorder %s69, %s70
      %p82 = scmp.eq.s32.totalorder %s18, 1
      %p83 = por %p81, %p82
      %p85 = scmp.ne.s32.totalorder %s70, %s84
      %p86 = scmp.eq.s32.totalorder %s18, 0
      %p87 = por %p85, %p86
      %s88 = ssub.s32 %s12, %s19
      %p89 = scmp.eq.s32.totalorder %s88, 0
      %s91 = sadd.s32 %s90, 1
      %s92 = scalar_select %p89, %s90, %s91
      %p95 = pneg %p89
      %p96 = scmp.eq.s32.totalorder %s12, 1
      %p97 = por %p95, %p96
      %p98 = scmp.ne.s32.totalorder %s90, %s93
      %p99 = scmp.eq.s32.totalorder %s12, 0
      %p100 = por %p98, %p99
      %p101 = scmp.ne.s32.totalorder %s90, %s93
      %p102 = scmp.eq.s32.totalorder %s17, 1
      %p103 = por %p101, %p102
      %p104 = scmp.ne.s32.totalorder %s93, %s94
      %p105 = scmp.eq.s32.totalorder %s17, 0
      %p106 = por %p104, %p105
      %p107 = scmp.ne.s32.totalorder %s93, %s94
      %p108 = scmp.eq.s32.totalorder %s18, 1
      %p109 = por %p107, %p108
      %p111 = scmp.ne.s32.totalorder %s94, %s110
      %p112 = scmp.eq.s32.totalorder %s18, 0
      %p113 = por %p111, %p112
      %p114 = scmp.le.s32.totalorder 1, %s12
      %p115 = scmp.lt.s32.totalorder %s12, 3
      %p116 = pnand %p114, %p115
      %p117 = pneg %p116
      // Predicated region
      $region9: #{patchcore_forward.9} parent=5 // pred_check
        _
      $region10: #{patchcore_forward.9} parent=5 // pred_check_branch
        %119 = sbr.rel (%p116) target = $region12
      $region11: #{patchcore_forward.9} parent=5 // pred_region
        %s120 = ssub.s32 %s12, 1
        // Predicated region
        $region13: #{patchcore_forward.9} parent=11 // pred_check
          %p121 = pneg %p59
        $region14: #{patchcore_forward.9} parent=11 // pred_check_branch
          %123 = sbr.rel (%p121) target = $region16
        $region15: #{patchcore_forward.9} parent=11 // pred_region
          _
        $region16: #{patchcore_forward.9} parent=11 // pred_fallthru
          _
        // Predicated region
        $region17: #{patchcore_forward.9} parent=11 // pred_check
          %p124 = pneg %p80
        $region18: #{patchcore_forward.9} parent=11 // pred_check_branch
          %126 = sbr.rel (%p124) target = $region20
        $region19: #{patchcore_forward.9} parent=11 // pred_region
          _
        $region20: #{patchcore_forward.9} parent=11 // pred_fallthru
          _
      $region12: #{patchcore_forward.9} parent=5 // pred_fallthru
        _
      %p127 = scmp.lt.s32.totalorder %s12, 2
      // Predicated region
      $region21: #{patchcore_forward.9} parent=5 // pred_check
        %p128 = pneg %p127
      $region22: #{patchcore_forward.9} parent=5 // pred_check_branch
        %130 = sbr.rel (%p128) target = $region24
      $region23: #{patchcore_forward.9} parent=5 // pred_region
        // Predicated region
        $region25: #{patchcore_forward.9} parent=23 // pred_check
          %p131 = pneg %p32
        $region26: #{patchcore_forward.9} parent=23 // pred_check_branch
          %133 = sbr.rel (%p131) target = $region28
        $region27: #{patchcore_forward.9} parent=23 // pred_region
          %p134 = scmp.lt.s32.totalorder %s12, 1
          %s135 = scalar_select %p134, %s12, 1
          %s136 = smul.addr %s135, 8
          %s137 = scalar_lea.vmem %s0, %s136
        $region28: #{patchcore_forward.9} parent=23 // pred_fallthru
          _
      $region24: #{patchcore_forward.9} parent=5 // pred_fallthru
        _
      %p138 = scmp.le.s32.totalorder 1, %s12
      %p139 = scmp.lt.s32.totalorder %s12, 3
      %p140 = pnand %p138, %p139
      %p141 = pneg %p140
      // Predicated region
      $region29: #{patchcore_forward.9} parent=5 // pred_check
        _
      $region30: #{patchcore_forward.9} parent=5 // pred_check_branch
        %143 = sbr.rel (%p140) target = $region32
      $region31: #{patchcore_forward.9} parent=5 // pred_region
        %s144 = ssub.s32 %s12, 1
        %p145 = scmp.lt.s32.totalorder %s17, 1
        %s146 = scalar_select %p145, %s17, 1
        %s147 = smul.addr %s146, 8
        %s148 = scalar_lea.vmem %s0, %s147
        %p149 = pneg %p38
        %p150 = pneg %p35
        %p151 = pneg %p59
        %p152 = pneg %p56
        %p153 = pneg %p80
        %p154 = pneg %p77
        %p155 = pneg %p106
        %p156 = pneg %p103
        %s157 = sand.u32 %s93, 1
        %s158 = scalar_lea.sflag [#allocation3], %s157
        %s159 = sand.u32 %s93, 1
        %s160 = smul.addr %s159, 32
        %s161 = scalar_lea.vmem [#allocation2], %s160
        %p162 = scmp.lt.s32.totalorder %s17, 1
        %s163 = scalar_select %p162, %s17, 1
        %s164 = smul.addr %s163, 8
        %s165 = scalar_lea.vmem %s0, %s164
        %v166 = vld [vmem:[%s165] sm:$0xff]
        %v167 = vld [vmem:[%s2] sm:$0xff]
        %vm168 = vcmask 64512
        %v170 = vsel %vm168, %v166, 0
        %172 = vmatpush.msra.mxu0 0.0
        %173 = vmatpush.msra.mxu0 0.0
        %174 = vmatpush.msra.mxu0 0.0
        %175 = vmatpush.msra.mxu0 0.0
        %176 = vmatpush.msra.mxu0 0.0
        %177 = vmatpush.msra.mxu0 0.0
        %178 = vmatpush.msra.mxu0 0.0
        %179 = vmatpush.msra.mxu0 0.0
        %180 = vmatpush.msra.mxu0 0.0
        %181 = vmatpush.msra.mxu0 0.0
        %182 = vmatpush.msra.mxu0 0.0
        %183 = vmatpush.msra.mxu0 0.0
        %184 = vmatpush.msra.mxu0 0.0
        %185 = vmatpush.msra.mxu0 0.0
        %186 = vmatpush.msra.mxu0 0.0
        %187 = vmatpush.msra.mxu0 %v167
        %188 = vmatmul.f32.gmra.mxu0 %v170
        %v189 = vpop.f32.mrf.mxu0
        %v190 = vadd.f32 0.0, %v189
        %191 = vdwg.mxu0
        %v192 = vld [vmem:[%s1] sm:$0xff]
        %v193 = vld [vmem:[%s1 + $0x8] sm:$0xff]
        %v194 = vld [vmem:[%s1 + $0x10] sm:$0xff]
        %v195 = vld [vmem:[%s1 + $0x18] sm:$0xff]
        %v197 = vsel %vm168, %v192, 0
        %v200 = vsel %vm168, %v193, 0
        %v203 = vsel %vm168, %v194, 0
        %v206 = vsel %vm168, %v195, 0
        %208 = vmatpush.msra.mxu0 0.0
        %209 = vmatpush.msra.mxu0 0.0
        %210 = vmatpush.msra.mxu0 0.0
        %211 = vmatpush.msra.mxu0 0.0
        %212 = vmatpush.msra.mxu0 0.0
        %213 = vmatpush.msra.mxu0 0.0
        %214 = vmatpush.msra.mxu0 0.0
        %215 = vmatpush.msra.mxu0 0.0
        %216 = vmatpush.msra.mxu0 0.0
        %217 = vmatpush.msra.mxu0 0.0
        %218 = vmatpush.msra.mxu0 0.0
        %219 = vmatpush.msra.mxu0 0.0
        %220 = vmatpush.msra.mxu0 0.0
        %221 = vmatpush.msra.mxu0 0.0
        %222 = vmatpush.msra.mxu0 0.0
        %223 = vmatpush.msra.mxu0 %v190
        %224 = vmatmul.f32.gmra.mxu0 %v197
        %v225 = vpop.f32.mrf.mxu0
        %v226 = vadd.f32 0.0, %v225
        %227 = vmatmul.f32.gmra.mxu0 %v200
        %v228 = vpop.f32.mrf.mxu0
        %v229 = vadd.f32 0.0, %v228
        %230 = vmatmul.f32.gmra.mxu0 %v203
        %v231 = vpop.f32.mrf.mxu0
        %v232 = vadd.f32 0.0, %v231
        %233 = vmatmul.f32.gmra.mxu0 %v206
        %v234 = vpop.f32.mrf.mxu0
        %v235 = vadd.f32 0.0, %v234
        %236 = vdwg.mxu0
        %237 = vst [vmem:[%s161] sm:$0xff] %v226
        %238 = vst [vmem:[%s161 + $0x8] sm:$0xff] %v229
        %239 = vst [vmem:[%s161 + $0x10] sm:$0xff] %v232
        %240 = vst [vmem:[%s161 + $0x18] sm:$0xff] %v235
        %s241 = sand.u32 %s93, 1
        %s242 = scalar_lea.sflag [#allocation3], %s241
        %s243 = sand.u32 %s93, 1
        %s244 = smul.addr %s243, 32
        %s245 = scalar_lea.vmem [#allocation2], %s244
        // Predicated region
        $region33: #{patchcore_forward.9} parent=31 // pred_check
          %p246 = pneg %p103
        $region34: #{patchcore_forward.9} parent=31 // pred_check_branch
          %248 = sbr.rel (%p246) target = $region36
        $region35: #{patchcore_forward.9} parent=31 // pred_region
          %250 = vsyncadd %s242, 0
          %s251 = smul.addr %s17, 4
          %s252 = smul.addr %s251, 8
          %s253 = scalar_lea.hbm %s3, %s252
          %s254 = sshll.u32 %s245, 4
          %s255 = int_to_ptr.vmem [resolvable:$true] %s254
          %s256 = sshll.u32 %s253, 4
          %s257 = int_to_ptr.hbm [resolvable:$true] %s256
          %262 = dma.vmem_to_hbm [thread:$0]  %s255, 512, %s257, %s242, 128, 128, 8
        $region36: #{patchcore_forward.9} parent=31 // pred_fallthru
          _
      $region32: #{patchcore_forward.9} parent=5 // pred_fallthru
        _
      %p263 = scmp.le.s32.totalorder 2, %s12
      // Predicated region
      $region37: #{patchcore_forward.9} parent=5 // pred_check
        %p264 = pneg %p263
      $region38: #{patchcore_forward.9} parent=5 // pred_check_branch
        %266 = sbr.rel (%p264) target = $region40
      $region39: #{patchcore_forward.9} parent=5 // pred_region
        %s267 = ssub.s32 %s12, 2
        // Predicated region
        $region41: #{patchcore_forward.9} parent=39 // pred_check
          %p268 = pneg %p109
        $region42: #{patchcore_forward.9} parent=39 // pred_check_branch
          %270 = sbr.rel (%p268) target = $region44
        $region43: #{patchcore_forward.9} parent=39 // pred_region
          %s271 = sand.u32 %s94, 1
          %s272 = scalar_lea.sflag [#allocation3], %s271
          %s273 = sand.u32 %s94, 1
          %s274 = smul.addr %s273, 32
          %s275 = scalar_lea.vmem [#allocation2], %s274
          %277 = dma.done %s272, 512
        $region44: #{patchcore_forward.9} parent=39 // pred_fallthru
          _
      $region40: #{patchcore_forward.9} parent=5 // pred_fallthru
        _
    $region6: #{patchcore_forward.9} parent=1 // loop_footer
      %s16 = sadd.s32 1, %s12
    $region7: #{patchcore_forward.9} parent=1 // loop_footer_branch
      %11 = sbr.rel target = $region3
    $region8: #{patchcore_forward.9} parent=1 // loop_exit
      _
    %278 = vsyncpa [#allocation3], 1
    %s279 = scalar_lea.sflag [#allocation3], 1
    %280 = vsyncpa %s279, 1

</llo_original>
